<compile_context>
chip_gen: v5e
topology: v5e:2x2
jax: 0.10.0
libtpu: 0.0.40
codegen_flags: <defaults>
</compile_context>

<pallas_src>
import math
import functools

import jax
import jax.numpy as jnp
from jax import lax
from jax.experimental import pallas as pl
from jax.experimental.pallas import tpu as pltpu

_MXU_DTYPE = jnp.bfloat16   # MXU operand dtype; accumulation stays f32.


def _encoder_block_kernel(
    x_ref,
    ln1_a_ref, ln1_b_ref,
    w_qkv_ref, b_qkv_ref,
    w_o_ref, b_o_ref,
    ln2_a_ref, ln2_b_ref,
    w_ff1_ref, b_ff1_ref,
    w_ff2_ref, b_ff2_ref,
    o_ref,
    *, h, d_k, eps,
):
    bt, s, d_model = x_ref.shape
    m = bt * s
    # Fold the batch tile into the matmul M dimension: every dense layer below
    # runs with M = bt*s rows instead of M = s.
    x = x_ref[...].astype(jnp.float32).reshape(m, d_model)

    def layer_norm(z, a_ref, b_ref):
        # torch.std default = UNBIASED (N-1); eps added to std (not variance).
        mean = jnp.mean(z, axis=-1, keepdims=True)
        c = z - mean
        var = jnp.sum(c * c, axis=-1, keepdims=True) * (1.0 / (d_model - 1))
        std = jnp.sqrt(var)
        return a_ref[...] * c / (std + eps) + b_ref[...]

    def linear_t(z, w_ref, b_ref):
        # z @ w.T + b with w in PyTorch (d_out, d_in) layout; bf16 operands on
        # the MXU, f32 accumulation, bias added in f32.
        return lax.dot_general(
            z.astype(_MXU_DTYPE), w_ref[...],
            (((1,), (1,)), ((), ())),
            preferred_element_type=jnp.float32,
        ) + b_ref[...]

    # -------------------- residual 1: x + MHA(LN1(x)) -----------------------
    y = layer_norm(x, ln1_a_ref, ln1_b_ref)
    qkv = linear_t(y, w_qkv_ref, b_qkv_ref)                 # (m, 3*d_model) f32
    qkv = qkv.reshape(bt, s, 3 * d_model)

    scale = 1.0 / math.sqrt(d_k)
    attn = jnp.zeros((m, d_model), jnp.float32)             # accumulated W_o out
    for head in range(h):                                   # static unroll
        lo = head * d_k
        q = (qkv[:, :, lo:lo + d_k] * scale).astype(_MXU_DTYPE)
        k = qkv[:, :, d_model + lo:d_model + lo + d_k].astype(_MXU_DTYPE)
        v = qkv[:, :, 2 * d_model + lo:2 * d_model + lo + d_k].astype(_MXU_DTYPE)
        # Batched (over bt) QK^T with no transpose.
        sc = jnp.einsum("bqd,bkd->bqk", q, k,
                        preferred_element_type=jnp.float32)          # (bt,s,s)
        sc = sc - jnp.max(sc, axis=-1, keepdims=True)                # stable
        p = jnp.exp(sc)
        denom = jnp.sum(p, axis=-1, keepdims=True)
        r = pl.reciprocal(denom, approx=True)                # EUP slot
        r = r * (2.0 - denom * r)                            # 1 Newton step
        p = p * r
        ctx = jnp.einsum("bqk,bkd->bqd", p.astype(_MXU_DTYPE), v,
                         preferred_element_type=jnp.float32)         # (bt,s,d_k)
        # Per-head output-projection accumulation: no concat of ctx heads, and
        # each head's temporaries die right here.
        attn = attn + lax.dot_general(
            ctx.reshape(m, d_k).astype(_MXU_DTYPE),
            w_o_ref[:, lo:lo + d_k],
            (((1,), (1,)), ((), ())),
            preferred_element_type=jnp.float32,
        )
    x1 = x + attn + b_o_ref[...]

    # -------------------- residual 2: x1 + FFN(LN2(x1)) ----------------------
    y2 = layer_norm(x1, ln2_a_ref, ln2_b_ref)
    hid = jnp.maximum(linear_t(y2, w_ff1_ref, b_ff1_ref), 0.0)       # ReLU
    out = x1 + linear_t(hid, w_ff2_ref, b_ff2_ref)

    o_ref[...] = out.reshape(bt, s, d_model).astype(o_ref.dtype)


def prepare_params(params, dtype=_MXU_DTYPE):
    """One-time parameter prep: fuse Q/K/V into one weight, reshape biases/LN
    params to lane rows, cast MXU weights to bf16.  Call once, outside the
    per-step forward (avoids rebuilding the fused weight in HBM every call)."""
    row = lambda v: v.reshape(1, -1).astype(jnp.float32)
    w = lambda v: v.astype(dtype)
    return dict(
        ln1_a=row(params["ln1_a"]), ln1_b=row(params["ln1_b"]),
        w_qkv=w(jnp.concatenate([params["w_q"], params["w_k"], params["w_v"]],
                                axis=0)),
        b_qkv=row(jnp.concatenate([params["b_q"], params["b_k"], params["b_v"]],
                                  axis=0)),
        w_o=w(params["w_o"]), b_o=row(params["b_o"]),
        ln2_a=row(params["ln2_a"]), ln2_b=row(params["ln2_b"]),
        w_ff1=w(params["w_ff1"]), b_ff1=row(params["b_ff1"]),
        w_ff2=w(params["w_ff2"]), b_ff2=row(params["b_ff2"]),
    )


def encoder_block_forward(x, src_mask, prepared, h, eps=1e-6, block_b=2):
    """Fused EncoderBlock forward.  x: (B, S, d_model)."""
    del src_mask  # reference's masked_fill is non-inplace & discarded => no-op
    B, S, d_model = x.shape
    assert d_model % h == 0
    d_k = d_model // h
    d_ff = prepared["w_ff1"].shape[0]

    bt = max(1, min(block_b, B))
    while B % bt:            # largest divisor of B that is <= block_b
        bt -= 1

    def full(shape):
        n = len(shape)
        return pl.BlockSpec(shape, lambda b, _n=n: (0,) * _n)

    kernel = functools.partial(_encoder_block_kernel, h=h, d_k=d_k, eps=eps)

    return pl.pallas_call(
        kernel,
        out_shape=jax.ShapeDtypeStruct((B, S, d_model), x.dtype),
        grid=(B // bt,),
        in_specs=[
            pl.BlockSpec((bt, S, d_model), lambda b: (b, 0, 0)),     # x
            full((1, d_model)), full((1, d_model)),                  # ln1 a/b
            full((3 * d_model, d_model)), full((1, 3 * d_model)),    # w_qkv/b_qkv
            full((d_model, d_model)), full((1, d_model)),            # w_o/b_o
            full((1, d_model)), full((1, d_model)),                  # ln2 a/b
            full((d_ff, d_model)), full((1, d_ff)),                  # ffn linear 1
            full((d_model, d_ff)), full((1, d_model)),               # ffn linear 2
        ],
        out_specs=pl.BlockSpec((bt, S, d_model), lambda b: (b, 0, 0)),
        compiler_params=pltpu.CompilerParams(
            dimension_semantics=("parallel",),        # batch tiles -> megacore
            vmem_limit_bytes=64 * 1024 * 1024,        # explicit scoped VMEM limit
        ),
    )(
        x,
        prepared["ln1_a"], prepared["ln1_b"],
        prepared["w_qkv"], prepared["b_qkv"],
        prepared["w_o"], prepared["b_o"],
        prepared["ln2_a"], prepared["ln2_b"],
        prepared["w_ff1"], prepared["b_ff1"],
        prepared["w_ff2"], prepared["b_ff2"],
    )


# ------------------------------ JAX reference ------------------------------ #
def encoder_block_reference(x, params, h, eps=1e-6):
    B, S, d_model = x.shape
    d_k = d_model // h

    def layer_norm(z, a, b):
        mean = z.mean(axis=-1, keepdims=True)
        std = jnp.std(z, axis=-1, keepdims=True, ddof=1)
        return a * (z - mean) / (std + eps) + b

    def lin(z, w, b):
        return z @ w.T + b

    def split(t):
        return t.reshape(B, S, h, d_k).transpose(0, 2, 1, 3)

    y = layer_norm(x, params["ln1_a"], params["ln1_b"])
    q = split(lin(y, params["w_q"], params["b_q"]))
    k = split(lin(y, params["w_k"], params["b_k"]))
    v = split(lin(y, params["w_v"], params["b_v"]))
    s = jnp.einsum("bhqd,bhkd->bhqk", q, k) / math.sqrt(d_k)
    p = jax.nn.softmax(s, axis=-1)
    ctx = jnp.einsum("bhqk,bhkd->bhqd", p, v).transpose(0, 2, 1, 3)
    ctx = ctx.reshape(B, S, d_model)
    x1 = x + lin(ctx, params["w_o"], params["b_o"])

    y2 = layer_norm(x1, params["ln2_a"], params["ln2_b"])
    ffn = lin(jnp.maximum(lin(y2, params["w_ff1"], params["b_ff1"]), 0.0),
              params["w_ff2"], params["b_ff2"])
    return x1 + ffn


# ---------------------------------- Main ----------------------------------- #
if __name__ == "__main__":
    # Small but lane-dense shapes: d_model / d_ff multiples of 128.
    B, S, d_model, h, d_ff = 4, 16, 128, 4, 256
    eps = 1e-6

    key = jax.random.PRNGKey(0)
    keys = jax.random.split(key, 16)

    def lin_init(kw, kb, d_out, d_in):
        # PyTorch nn.Linear default: U(-1/sqrt(d_in), 1/sqrt(d_in))
        bound = 1.0 / math.sqrt(d_in)
        w = jax.random.uniform(kw, (d_out, d_in), jnp.float32, -bound, bound)
        b = jax.random.uniform(kb, (d_out,), jnp.float32, -bound, bound)
        return w, b

    w_q, b_q = lin_init(keys[0], keys[1], d_model, d_model)
    w_k, b_k = lin_init(keys[2], keys[3], d_model, d_model)
    w_v, b_v = lin_init(keys[4], keys[5], d_model, d_model)
    w_o, b_o = lin_init(keys[6], keys[7], d_model, d_model)
    w_ff1, b_ff1 = lin_init(keys[8], keys[9], d_ff, d_model)
    w_ff2, b_ff2 = lin_init(keys[10], keys[11], d_model, d_ff)

    params = dict(
        w_q=w_q, b_q=b_q, w_k=w_k, b_k=b_k, w_v=w_v, b_v=b_v, w_o=w_o, b_o=b_o,
        ln1_a=jnp.ones((d_model,), jnp.float32),
        ln1_b=jnp.zeros((d_model,), jnp.float32),
        ln2_a=jnp.ones((d_model,), jnp.float32),
        ln2_b=jnp.zeros((d_model,), jnp.float32),
        w_ff1=w_ff1, b_ff1=b_ff1, w_ff2=w_ff2, b_ff2=b_ff2,
    )

    x = jax.random.normal(keys[12], (B, S, d_model), jnp.float32)
    src_mask = jnp.ones((B, 1, S, S), jnp.float32)

    prepared = prepare_params(params)                 # one-time weight prep
    out = encoder_block_forward(x, src_mask, prepared, h, eps=eps, block_b=2)
    out = jax.block_until_ready(out)
    ref = encoder_block_reference(x, params, h, eps=eps)

    assert out.shape == (B, S, d_model)
    # Tolerance covers bf16 MXU operands (f32 accumulation); the softmax
    # reciprocal is Newton-refined so it contributes essentially no error.
    assert jnp.allclose(out, ref, atol=5e-2, rtol=5e-2), (
        f"mismatch vs reference: max abs err = {jnp.max(jnp.abs(out - ref))}"
    )
    print("KERNEL_OK")
</pallas_src>

<mosaic_0001>
module attributes {stable_mosaic.version = 11 : i64} {
  func.func @_encoder_block_kernel(%arg0: i32, %arg1: memref<2x16x128xf32, #tpu.memory_space<vmem>>, %arg2: memref<1x128xf32, #tpu.memory_space<vmem>>, %arg3: memref<1x128xf32, #tpu.memory_space<vmem>>, %arg4: memref<384x128xbf16, #tpu.memory_space<vmem>>, %arg5: memref<1x384xf32, #tpu.memory_space<vmem>>, %arg6: memref<128x128xbf16, #tpu.memory_space<vmem>>, %arg7: memref<1x128xf32, #tpu.memory_space<vmem>>, %arg8: memref<1x128xf32, #tpu.memory_space<vmem>>, %arg9: memref<1x128xf32, #tpu.memory_space<vmem>>, %arg10: memref<256x128xbf16, #tpu.memory_space<vmem>>, %arg11: memref<1x256xf32, #tpu.memory_space<vmem>>, %arg12: memref<128x256xbf16, #tpu.memory_space<vmem>>, %arg13: memref<1x128xf32, #tpu.memory_space<vmem>>, %arg14: memref<2x16x128xf32, #tpu.memory_space<vmem>>) attributes {dimension_semantics = [#tpu.dimension_semantics<parallel>], iteration_bounds = array<i64: 2>, scalar_prefetch = 0 : i64, scratch_operands = 0 : i64, tpu.core_type = #tpu.core_type<tc>, window_params = [{transform_indices = @transform_0, window_bounds = array<i64: 2, 16, 128>}, {pipeline_mode = #tpu.pipeline_mode<synchronous>, transform_indices = @transform_1, window_bounds = array<i64: 1, 128>}, {pipeline_mode = #tpu.pipeline_mode<synchronous>, transform_indices = @transform_2, window_bounds = array<i64: 1, 128>}, {pipeline_mode = #tpu.pipeline_mode<synchronous>, transform_indices = @transform_3, window_bounds = array<i64: 384, 128>}, {pipeline_mode = #tpu.pipeline_mode<synchronous>, transform_indices = @transform_4, window_bounds = array<i64: 1, 384>}, {pipeline_mode = #tpu.pipeline_mode<synchronous>, transform_indices = @transform_5, window_bounds = array<i64: 128, 128>}, {pipeline_mode = #tpu.pipeline_mode<synchronous>, transform_indices = @transform_6, window_bounds = array<i64: 1, 128>}, {pipeline_mode = #tpu.pipeline_mode<synchronous>, transform_indices = @transform_7, window_bounds = array<i64: 1, 128>}, {pipeline_mode = #tpu.pipeline_mode<synchronous>, transform_indices = @transform_8, window_bounds = array<i64: 1, 128>}, {pipeline_mode = #tpu.pipeline_mode<synchronous>, transform_indices = @transform_9, window_bounds = array<i64: 256, 128>}, {pipeline_mode = #tpu.pipeline_mode<synchronous>, transform_indices = @transform_10, window_bounds = array<i64: 1, 256>}, {pipeline_mode = #tpu.pipeline_mode<synchronous>, transform_indices = @transform_11, window_bounds = array<i64: 128, 256>}, {pipeline_mode = #tpu.pipeline_mode<synchronous>, transform_indices = @transform_12, window_bounds = array<i64: 1, 128>}, {transform_indices = @transform_13, window_bounds = array<i64: 2, 16, 128>}]} {
    %c0 = arith.constant 0 : index
    %c0_0 = arith.constant 0 : index
    %c0_1 = arith.constant 0 : index
    %0 = vector.load %arg1[%c0, %c0_0, %c0_1] : memref<2x16x128xf32, #tpu.memory_space<vmem>>, vector<2x16x128xf32>
    %1 = vector.shape_cast %0 : vector<2x16x128xf32> to vector<32x128xf32>
    %cst = arith.constant dense<0.000000e+00> : vector<32xf32>
    %2 = vector.multi_reduction <add>, %1, %cst [1] : vector<32x128xf32> to vector<32xf32>
    %3 = vector.shape_cast %2 : vector<32xf32> to vector<32x1xf32>
    %cst_2 = arith.constant 1.280000e+02 : f32
    %4 = vector.broadcast %cst_2 : f32 to vector<32x1xf32>
    %5 = arith.divf %3, %4 : vector<32x1xf32>
    %6 = vector.broadcast %5 : vector<32x1xf32> to vector<32x128xf32>
    %7 = arith.subf %1, %6 : vector<32x128xf32>
    %8 = arith.mulf %7, %7 : vector<32x128xf32>
    %cst_3 = arith.constant dense<0.000000e+00> : vector<32xf32>
    %9 = vector.multi_reduction <add>, %8, %cst_3 [1] : vector<32x128xf32> to vector<32xf32>
    %10 = vector.shape_cast %9 : vector<32xf32> to vector<32x1xf32>
    %cst_4 = arith.constant 0.00787401571 : f32
    %11 = vector.broadcast %cst_4 : f32 to vector<32x1xf32>
    %12 = arith.mulf %10, %11 : vector<32x1xf32>
    %13 = math.sqrt %12 : vector<32x1xf32>
    %c0_5 = arith.constant 0 : index
    %c0_6 = arith.constant 0 : index
    %14 = vector.load %arg2[%c0_5, %c0_6] : memref<1x128xf32, #tpu.memory_space<vmem>>, vector<1x128xf32>
    %15 = vector.broadcast %14 : vector<1x128xf32> to vector<32x128xf32>
    %16 = arith.mulf %15, %7 : vector<32x128xf32>
    %cst_7 = arith.constant 9.99999997E-7 : f32
    %17 = vector.broadcast %cst_7 : f32 to vector<32x1xf32>
    %18 = arith.addf %13, %17 : vector<32x1xf32>
    %19 = vector.broadcast %18 : vector<32x1xf32> to vector<32x128xf32>
    %20 = arith.divf %16, %19 : vector<32x128xf32>
    %c0_8 = arith.constant 0 : index
    %c0_9 = arith.constant 0 : index
    %21 = vector.load %arg3[%c0_8, %c0_9] : memref<1x128xf32, #tpu.memory_space<vmem>>, vector<1x128xf32>
    %22 = vector.broadcast %21 : vector<1x128xf32> to vector<32x128xf32>
    %23 = arith.addf %20, %22 : vector<32x128xf32>
    %24 = arith.truncf %23 : vector<32x128xf32> to vector<32x128xbf16>
    %c0_10 = arith.constant 0 : index
    %c0_11 = arith.constant 0 : index
    %25 = vector.load %arg4[%c0_10, %c0_11] : memref<384x128xbf16, #tpu.memory_space<vmem>>, vector<384x128xbf16>
    %cst_12 = arith.constant dense<0.000000e+00> : vector<32x384xf32>
    %26 = tpu.matmul %24, %25, %cst_12 {dimension_numbers = #tpu.dot_dimension_numbers<[1], [1], [0], [0], [0, 0, 1, 0], [], []>} : vector<32x128xbf16>, vector<384x128xbf16>, vector<32x384xf32> -> vector<32x384xf32>
    %c0_13 = arith.constant 0 : index
    %c0_14 = arith.constant 0 : index
    %27 = vector.load %arg5[%c0_13, %c0_14] : memref<1x384xf32, #tpu.memory_space<vmem>>, vector<1x384xf32>
    %28 = vector.broadcast %27 : vector<1x384xf32> to vector<32x384xf32>
    %29 = arith.addf %26, %28 : vector<32x384xf32>
    %30 = vector.shape_cast %29 : vector<32x384xf32> to vector<2x16x384xf32>
    %cst_15 = arith.constant 0.000000e+00 : f32
    %31 = vector.broadcast %cst_15 : f32 to vector<32x128xf32>
    %32 = vector.extract_strided_slice %30 {offsets = [0, 0, 0], sizes = [2, 16, 32], strides = [1, 1, 1]} : vector<2x16x384xf32> to vector<2x16x32xf32>
    %cst_16 = arith.constant 0.176776692 : f32
    %33 = vector.broadcast %cst_16 : f32 to vector<2x16x32xf32>
    %34 = arith.mulf %32, %33 : vector<2x16x32xf32>
    %35 = arith.truncf %34 : vector<2x16x32xf32> to vector<2x16x32xbf16>
    %36 = vector.extract_strided_slice %30 {offsets = [0, 0, 128], sizes = [2, 16, 32], strides = [1, 1, 1]} : vector<2x16x384xf32> to vector<2x16x32xf32>
    %37 = arith.truncf %36 : vector<2x16x32xf32> to vector<2x16x32xbf16>
    %38 = vector.extract_strided_slice %30 {offsets = [0, 0, 256], sizes = [2, 16, 32], strides = [1, 1, 1]} : vector<2x16x384xf32> to vector<2x16x32xf32>
    %39 = arith.truncf %38 : vector<2x16x32xf32> to vector<2x16x32xbf16>
    "tpu.trace_start"() <{level = 10 : i32, message = "bqd,bkd->bqk"}> : () -> ()
    %cst_17 = arith.constant dense<0.000000e+00> : vector<2x16x16xf32>
    %40 = tpu.matmul %35, %37, %cst_17 {dimension_numbers = #tpu.dot_dimension_numbers<[2], [2], [1], [1], [0, 0, 0, 1, 1, 1], [0], [0]>} : vector<2x16x32xbf16>, vector<2x16x32xbf16>, vector<2x16x16xf32> -> vector<2x16x16xf32>
    "tpu.trace_stop"() : () -> ()
    %cst_18 = arith.constant dense<0xFF800000> : vector<2x16xf32>
    %41 = vector.multi_reduction <maximumf>, %40, %cst_18 [2] : vector<2x16x16xf32> to vector<2x16xf32>
    %42 = vector.shape_cast %41 : vector<2x16xf32> to vector<2x16x1xf32>
    %43 = vector.broadcast %42 : vector<2x16x1xf32> to vector<2x16x16xf32>
    %44 = arith.subf %40, %43 : vector<2x16x16xf32>
    %45 = math.exp %44 : vector<2x16x16xf32>
    %cst_19 = arith.constant dense<0.000000e+00> : vector<2x16xf32>
    %46 = vector.multi_reduction <add>, %45, %cst_19 [2] : vector<2x16x16xf32> to vector<2x16xf32>
    %47 = vector.shape_cast %46 : vector<2x16xf32> to vector<2x16x1xf32>
    %48 = tpu.reciprocal %47 {approx = true} : vector<2x16x1xf32> -> vector<2x16x1xf32>
    %49 = arith.mulf %47, %48 : vector<2x16x1xf32>
    %cst_20 = arith.constant 2.000000e+00 : f32
    %50 = vector.broadcast %cst_20 : f32 to vector<2x16x1xf32>
    %51 = arith.subf %50, %49 : vector<2x16x1xf32>
    %52 = arith.mulf %48, %51 : vector<2x16x1xf32>
    %53 = vector.broadcast %52 : vector<2x16x1xf32> to vector<2x16x16xf32>
    %54 = arith.mulf %45, %53 : vector<2x16x16xf32>
    %55 = arith.truncf %54 : vector<2x16x16xf32> to vector<2x16x16xbf16>
    "tpu.trace_start"() <{level = 10 : i32, message = "bqk,bkd->bqd"}> : () -> ()
    %cst_21 = arith.constant dense<0.000000e+00> : vector<2x16x32xf32>
    %56 = tpu.matmul %55, %39, %cst_21 {dimension_numbers = #tpu.dot_dimension_numbers<[2], [1], [1], [2], [0, 0, 0, 1, 1, 2], [0], [0]>} : vector<2x16x16xbf16>, vector<2x16x32xbf16>, vector<2x16x32xf32> -> vector<2x16x32xf32>
    "tpu.trace_stop"() : () -> ()
    %57 = vector.shape_cast %56 : vector<2x16x32xf32> to vector<32x32xf32>
    %58 = arith.truncf %57 : vector<32x32xf32> to vector<32x32xbf16>
    %c0_22 = arith.constant 0 : index
    %c0_23 = arith.constant 0 : index
    %59 = vector.load %arg6[%c0_22, %c0_23] : memref<128x128xbf16, #tpu.memory_space<vmem>>, vector<128x32xbf16>
    %cst_24 = arith.constant dense<0.000000e+00> : vector<32x128xf32>
    %60 = tpu.matmul %58, %59, %cst_24 {dimension_numbers = #tpu.dot_dimension_numbers<[1], [1], [0], [0], [0, 0, 1, 0], [], []>} : vector<32x32xbf16>, vector<128x32xbf16>, vector<32x128xf32> -> vector<32x128xf32>
    %61 = arith.addf %31, %60 : vector<32x128xf32>
    %62 = vector.extract_strided_slice %30 {offsets = [0, 0, 32], sizes = [2, 16, 32], strides = [1, 1, 1]} : vector<2x16x384xf32> to vector<2x16x32xf32>
    %cst_25 = arith.constant 0.176776692 : f32
    %63 = vector.broadcast %cst_25 : f32 to vector<2x16x32xf32>
    %64 = arith.mulf %62, %63 : vector<2x16x32xf32>
    %65 = arith.truncf %64 : vector<2x16x32xf32> to vector<2x16x32xbf16>
    %66 = vector.extract_strided_slice %30 {offsets = [0, 0, 160], sizes = [2, 16, 32], strides = [1, 1, 1]} : vector<2x16x384xf32> to vector<2x16x32xf32>
    %67 = arith.truncf %66 : vector<2x16x32xf32> to vector<2x16x32xbf16>
    %68 = vector.extract_strided_slice %30 {offsets = [0, 0, 288], sizes = [2, 16, 32], strides = [1, 1, 1]} : vector<2x16x384xf32> to vector<2x16x32xf32>
    %69 = arith.truncf %68 : vector<2x16x32xf32> to vector<2x16x32xbf16>
    "tpu.trace_start"() <{level = 10 : i32, message = "bqd,bkd->bqk"}> : () -> ()
    %cst_26 = arith.constant dense<0.000000e+00> : vector<2x16x16xf32>
    %70 = tpu.matmul %65, %67, %cst_26 {dimension_numbers = #tpu.dot_dimension_numbers<[2], [2], [1], [1], [0, 0, 0, 1, 1, 1], [0], [0]>} : vector<2x16x32xbf16>, vector<2x16x32xbf16>, vector<2x16x16xf32> -> vector<2x16x16xf32>
    "tpu.trace_stop"() : () -> ()
    %cst_27 = arith.constant dense<0xFF800000> : vector<2x16xf32>
    %71 = vector.multi_reduction <maximumf>, %70, %cst_27 [2] : vector<2x16x16xf32> to vector<2x16xf32>
    %72 = vector.shape_cast %71 : vector<2x16xf32> to vector<2x16x1xf32>
    %73 = vector.broadcast %72 : vector<2x16x1xf32> to vector<2x16x16xf32>
    %74 = arith.subf %70, %73 : vector<2x16x16xf32>
    %75 = math.exp %74 : vector<2x16x16xf32>
    %cst_28 = arith.constant dense<0.000000e+00> : vector<2x16xf32>
    %76 = vector.multi_reduction <add>, %75, %cst_28 [2] : vector<2x16x16xf32> to vector<2x16xf32>
    %77 = vector.shape_cast %76 : vector<2x16xf32> to vector<2x16x1xf32>
    %78 = tpu.reciprocal %77 {approx = true} : vector<2x16x1xf32> -> vector<2x16x1xf32>
    %79 = arith.mulf %77, %78 : vector<2x16x1xf32>
    %cst_29 = arith.constant 2.000000e+00 : f32
    %80 = vector.broadcast %cst_29 : f32 to vector<2x16x1xf32>
    %81 = arith.subf %80, %79 : vector<2x16x1xf32>
    %82 = arith.mulf %78, %81 : vector<2x16x1xf32>
    %83 = vector.broadcast %82 : vector<2x16x1xf32> to vector<2x16x16xf32>
    %84 = arith.mulf %75, %83 : vector<2x16x16xf32>
    %85 = arith.truncf %84 : vector<2x16x16xf32> to vector<2x16x16xbf16>
    "tpu.trace_start"() <{level = 10 : i32, message = "bqk,bkd->bqd"}> : () -> ()
    %cst_30 = arith.constant dense<0.000000e+00> : vector<2x16x32xf32>
    %86 = tpu.matmul %85, %69, %cst_30 {dimension_numbers = #tpu.dot_dimension_numbers<[2], [1], [1], [2], [0, 0, 0, 1, 1, 2], [0], [0]>} : vector<2x16x16xbf16>, vector<2x16x32xbf16>, vector<2x16x32xf32> -> vector<2x16x32xf32>
    "tpu.trace_stop"() : () -> ()
    %87 = vector.shape_cast %86 : vector<2x16x32xf32> to vector<32x32xf32>
    %88 = arith.truncf %87 : vector<32x32xf32> to vector<32x32xbf16>
    %c0_31 = arith.constant 0 : index
    %c32 = arith.constant 32 : index
    %89 = vector.load %arg6[%c0_31, %c32] : memref<128x128xbf16, #tpu.memory_space<vmem>>, vector<128x32xbf16>
    %cst_32 = arith.constant dense<0.000000e+00> : vector<32x128xf32>
    %90 = tpu.matmul %88, %89, %cst_32 {dimension_numbers = #tpu.dot_dimension_numbers<[1], [1], [0], [0], [0, 0, 1, 0], [], []>} : vector<32x32xbf16>, vector<128x32xbf16>, vector<32x128xf32> -> vector<32x128xf32>
    %91 = arith.addf %61, %90 : vector<32x128xf32>
    %92 = vector.extract_strided_slice %30 {offsets = [0, 0, 64], sizes = [2, 16, 32], strides = [1, 1, 1]} : vector<2x16x384xf32> to vector<2x16x32xf32>
    %cst_33 = arith.constant 0.176776692 : f32
    %93 = vector.broadcast %cst_33 : f32 to vector<2x16x32xf32>
    %94 = arith.mulf %92, %93 : vector<2x16x32xf32>
    %95 = arith.truncf %94 : vector<2x16x32xf32> to vector<2x16x32xbf16>
    %96 = vector.extract_strided_slice %30 {offsets = [0, 0, 192], sizes = [2, 16, 32], strides = [1, 1, 1]} : vector<2x16x384xf32> to vector<2x16x32xf32>
    %97 = arith.truncf %96 : vector<2x16x32xf32> to vector<2x16x32xbf16>
    %98 = vector.extract_strided_slice %30 {offsets = [0, 0, 320], sizes = [2, 16, 32], strides = [1, 1, 1]} : vector<2x16x384xf32> to vector<2x16x32xf32>
    %99 = arith.truncf %98 : vector<2x16x32xf32> to vector<2x16x32xbf16>
    "tpu.trace_start"() <{level = 10 : i32, message = "bqd,bkd->bqk"}> : () -> ()
    %cst_34 = arith.constant dense<0.000000e+00> : vector<2x16x16xf32>
    %100 = tpu.matmul %95, %97, %cst_34 {dimension_numbers = #tpu.dot_dimension_numbers<[2], [2], [1], [1], [0, 0, 0, 1, 1, 1], [0], [0]>} : vector<2x16x32xbf16>, vector<2x16x32xbf16>, vector<2x16x16xf32> -> vector<2x16x16xf32>
    "tpu.trace_stop"() : () -> ()
    %cst_35 = arith.constant dense<0xFF800000> : vector<2x16xf32>
    %101 = vector.multi_reduction <maximumf>, %100, %cst_35 [2] : vector<2x16x16xf32> to vector<2x16xf32>
    %102 = vector.shape_cast %101 : vector<2x16xf32> to vector<2x16x1xf32>
    %103 = vector.broadcast %102 : vector<2x16x1xf32> to vector<2x16x16xf32>
    %104 = arith.subf %100, %103 : vector<2x16x16xf32>
    %105 = math.exp %104 : vector<2x16x16xf32>
    %cst_36 = arith.constant dense<0.000000e+00> : vector<2x16xf32>
    %106 = vector.multi_reduction <add>, %105, %cst_36 [2] : vector<2x16x16xf32> to vector<2x16xf32>
    %107 = vector.shape_cast %106 : vector<2x16xf32> to vector<2x16x1xf32>
    %108 = tpu.reciprocal %107 {approx = true} : vector<2x16x1xf32> -> vector<2x16x1xf32>
    %109 = arith.mulf %107, %108 : vector<2x16x1xf32>
    %cst_37 = arith.constant 2.000000e+00 : f32
    %110 = vector.broadcast %cst_37 : f32 to vector<2x16x1xf32>
    %111 = arith.subf %110, %109 : vector<2x16x1xf32>
    %112 = arith.mulf %108, %111 : vector<2x16x1xf32>
    %113 = vector.broadcast %112 : vector<2x16x1xf32> to vector<2x16x16xf32>
    %114 = arith.mulf %105, %113 : vector<2x16x16xf32>
    %115 = arith.truncf %114 : vector<2x16x16xf32> to vector<2x16x16xbf16>
    "tpu.trace_start"() <{level = 10 : i32, message = "bqk,bkd->bqd"}> : () -> ()
    %cst_38 = arith.constant dense<0.000000e+00> : vector<2x16x32xf32>
    %116 = tpu.matmul %115, %99, %cst_38 {dimension_numbers = #tpu.dot_dimension_numbers<[2], [1], [1], [2], [0, 0, 0, 1, 1, 2], [0], [0]>} : vector<2x16x16xbf16>, vector<2x16x32xbf16>, vector<2x16x32xf32> -> vector<2x16x32xf32>
    "tpu.trace_stop"() : () -> ()
    %117 = vector.shape_cast %116 : vector<2x16x32xf32> to vector<32x32xf32>
    %118 = arith.truncf %117 : vector<32x32xf32> to vector<32x32xbf16>
    %c0_39 = arith.constant 0 : index
    %c64 = arith.constant 64 : index
    %119 = vector.load %arg6[%c0_39, %c64] : memref<128x128xbf16, #tpu.memory_space<vmem>>, vector<128x32xbf16>
    %cst_40 = arith.constant dense<0.000000e+00> : vector<32x128xf32>
    %120 = tpu.matmul %118, %119, %cst_40 {dimension_numbers = #tpu.dot_dimension_numbers<[1], [1], [0], [0], [0, 0, 1, 0], [], []>} : vector<32x32xbf16>, vector<128x32xbf16>, vector<32x128xf32> -> vector<32x128xf32>
    %121 = arith.addf %91, %120 : vector<32x128xf32>
    %122 = vector.extract_strided_slice %30 {offsets = [0, 0, 96], sizes = [2, 16, 32], strides = [1, 1, 1]} : vector<2x16x384xf32> to vector<2x16x32xf32>
    %cst_41 = arith.constant 0.176776692 : f32
    %123 = vector.broadcast %cst_41 : f32 to vector<2x16x32xf32>
    %124 = arith.mulf %122, %123 : vector<2x16x32xf32>
    %125 = arith.truncf %124 : vector<2x16x32xf32> to vector<2x16x32xbf16>
    %126 = vector.extract_strided_slice %30 {offsets = [0, 0, 224], sizes = [2, 16, 32], strides = [1, 1, 1]} : vector<2x16x384xf32> to vector<2x16x32xf32>
    %127 = arith.truncf %126 : vector<2x16x32xf32> to vector<2x16x32xbf16>
    %128 = vector.extract_strided_slice %30 {offsets = [0, 0, 352], sizes = [2, 16, 32], strides = [1, 1, 1]} : vector<2x16x384xf32> to vector<2x16x32xf32>
    %129 = arith.truncf %128 : vector<2x16x32xf32> to vector<2x16x32xbf16>
    "tpu.trace_start"() <{level = 10 : i32, message = "bqd,bkd->bqk"}> : () -> ()
    %cst_42 = arith.constant dense<0.000000e+00> : vector<2x16x16xf32>
    %130 = tpu.matmul %125, %127, %cst_42 {dimension_numbers = #tpu.dot_dimension_numbers<[2], [2], [1], [1], [0, 0, 0, 1, 1, 1], [0], [0]>} : vector<2x16x32xbf16>, vector<2x16x32xbf16>, vector<2x16x16xf32> -> vector<2x16x16xf32>
    "tpu.trace_stop"() : () -> ()
    %cst_43 = arith.constant dense<0xFF800000> : vector<2x16xf32>
    %131 = vector.multi_reduction <maximumf>, %130, %cst_43 [2] : vector<2x16x16xf32> to vector<2x16xf32>
    %132 = vector.shape_cast %131 : vector<2x16xf32> to vector<2x16x1xf32>
    %133 = vector.broadcast %132 : vector<2x16x1xf32> to vector<2x16x16xf32>
    %134 = arith.subf %130, %133 : vector<2x16x16xf32>
    %135 = math.exp %134 : vector<2x16x16xf32>
    %cst_44 = arith.constant dense<0.000000e+00> : vector<2x16xf32>
    %136 = vector.multi_reduction <add>, %135, %cst_44 [2] : vector<2x16x16xf32> to vector<2x16xf32>
    %137 = vector.shape_cast %136 : vector<2x16xf32> to vector<2x16x1xf32>
    %138 = tpu.reciprocal %137 {approx = true} : vector<2x16x1xf32> -> vector<2x16x1xf32>
    %139 = arith.mulf %137, %138 : vector<2x16x1xf32>
    %cst_45 = arith.constant 2.000000e+00 : f32
    %140 = vector.broadcast %cst_45 : f32 to vector<2x16x1xf32>
    %141 = arith.subf %140, %139 : vector<2x16x1xf32>
    %142 = arith.mulf %138, %141 : vector<2x16x1xf32>
    %143 = vector.broadcast %142 : vector<2x16x1xf32> to vector<2x16x16xf32>
    %144 = arith.mulf %135, %143 : vector<2x16x16xf32>
    %145 = arith.truncf %144 : vector<2x16x16xf32> to vector<2x16x16xbf16>
    "tpu.trace_start"() <{level = 10 : i32, message = "bqk,bkd->bqd"}> : () -> ()
    %cst_46 = arith.constant dense<0.000000e+00> : vector<2x16x32xf32>
    %146 = tpu.matmul %145, %129, %cst_46 {dimension_numbers = #tpu.dot_dimension_numbers<[2], [1], [1], [2], [0, 0, 0, 1, 1, 2], [0], [0]>} : vector<2x16x16xbf16>, vector<2x16x32xbf16>, vector<2x16x32xf32> -> vector<2x16x32xf32>
    "tpu.trace_stop"() : () -> ()
    %147 = vector.shape_cast %146 : vector<2x16x32xf32> to vector<32x32xf32>
    %148 = arith.truncf %147 : vector<32x32xf32> to vector<32x32xbf16>
    %c0_47 = arith.constant 0 : index
    %c96 = arith.constant 96 : index
    %149 = vector.load %arg6[%c0_47, %c96] : memref<128x128xbf16, #tpu.memory_space<vmem>>, vector<128x32xbf16>
    %cst_48 = arith.constant dense<0.000000e+00> : vector<32x128xf32>
    %150 = tpu.matmul %148, %149, %cst_48 {dimension_numbers = #tpu.dot_dimension_numbers<[1], [1], [0], [0], [0, 0, 1, 0], [], []>} : vector<32x32xbf16>, vector<128x32xbf16>, vector<32x128xf32> -> vector<32x128xf32>
    %151 = arith.addf %121, %150 : vector<32x128xf32>
    %152 = arith.addf %1, %151 : vector<32x128xf32>
    %c0_49 = arith.constant 0 : index
    %c0_50 = arith.constant 0 : index
    %153 = vector.load %arg7[%c0_49, %c0_50] : memref<1x128xf32, #tpu.memory_space<vmem>>, vector<1x128xf32>
    %154 = vector.broadcast %153 : vector<1x128xf32> to vector<32x128xf32>
    %155 = arith.addf %152, %154 : vector<32x128xf32>
    %cst_51 = arith.constant dense<0.000000e+00> : vector<32xf32>
    %156 = vector.multi_reduction <add>, %155, %cst_51 [1] : vector<32x128xf32> to vector<32xf32>
    %157 = vector.shape_cast %156 : vector<32xf32> to vector<32x1xf32>
    %cst_52 = arith.constant 1.280000e+02 : f32
    %158 = vector.broadcast %cst_52 : f32 to vector<32x1xf32>
    %159 = arith.divf %157, %158 : vector<32x1xf32>
    %160 = vector.broadcast %159 : vector<32x1xf32> to vector<32x128xf32>
    %161 = arith.subf %155, %160 : vector<32x128xf32>
    %162 = arith.mulf %161, %161 : vector<32x128xf32>
    %cst_53 = arith.constant dense<0.000000e+00> : vector<32xf32>
    %163 = vector.multi_reduction <add>, %162, %cst_53 [1] : vector<32x128xf32> to vector<32xf32>
    %164 = vector.shape_cast %163 : vector<32xf32> to vector<32x1xf32>
    %cst_54 = arith.constant 0.00787401571 : f32
    %165 = vector.broadcast %cst_54 : f32 to vector<32x1xf32>
    %166 = arith.mulf %164, %165 : vector<32x1xf32>
    %167 = math.sqrt %166 : vector<32x1xf32>
    %c0_55 = arith.constant 0 : index
    %c0_56 = arith.constant 0 : index
    %168 = vector.load %arg8[%c0_55, %c0_56] : memref<1x128xf32, #tpu.memory_space<vmem>>, vector<1x128xf32>
    %169 = vector.broadcast %168 : vector<1x128xf32> to vector<32x128xf32>
    %170 = arith.mulf %169, %161 : vector<32x128xf32>
    %cst_57 = arith.constant 9.99999997E-7 : f32
    %171 = vector.broadcast %cst_57 : f32 to vector<32x1xf32>
    %172 = arith.addf %167, %171 : vector<32x1xf32>
    %173 = vector.broadcast %172 : vector<32x1xf32> to vector<32x128xf32>
    %174 = arith.divf %170, %173 : vector<32x128xf32>
    %c0_58 = arith.constant 0 : index
    %c0_59 = arith.constant 0 : index
    %175 = vector.load %arg9[%c0_58, %c0_59] : memref<1x128xf32, #tpu.memory_space<vmem>>, vector<1x128xf32>
    %176 = vector.broadcast %175 : vector<1x128xf32> to vector<32x128xf32>
    %177 = arith.addf %174, %176 : vector<32x128xf32>
    %178 = arith.truncf %177 : vector<32x128xf32> to vector<32x128xbf16>
    %c0_60 = arith.constant 0 : index
    %c0_61 = arith.constant 0 : index
    %179 = vector.load %arg10[%c0_60, %c0_61] : memref<256x128xbf16, #tpu.memory_space<vmem>>, vector<256x128xbf16>
    %cst_62 = arith.constant dense<0.000000e+00> : vector<32x256xf32>
    %180 = tpu.matmul %178, %179, %cst_62 {dimension_numbers = #tpu.dot_dimension_numbers<[1], [1], [0], [0], [0, 0, 1, 0], [], []>} : vector<32x128xbf16>, vector<256x128xbf16>, vector<32x256xf32> -> vector<32x256xf32>
    %c0_63 = arith.constant 0 : index
    %c0_64 = arith.constant 0 : index
    %181 = vector.load %arg11[%c0_63, %c0_64] : memref<1x256xf32, #tpu.memory_space<vmem>>, vector<1x256xf32>
    %182 = vector.broadcast %181 : vector<1x256xf32> to vector<32x256xf32>
    %183 = arith.addf %180, %182 : vector<32x256xf32>
    %cst_65 = arith.constant 0.000000e+00 : f32
    %184 = vector.broadcast %cst_65 : f32 to vector<32x256xf32>
    %185 = arith.maximumf %183, %184 : vector<32x256xf32>
    %186 = arith.truncf %185 : vector<32x256xf32> to vector<32x256xbf16>
    %c0_66 = arith.constant 0 : index
    %c0_67 = arith.constant 0 : index
    %187 = vector.load %arg12[%c0_66, %c0_67] : memref<128x256xbf16, #tpu.memory_space<vmem>>, vector<128x256xbf16>
    %cst_68 = arith.constant dense<0.000000e+00> : vector<32x128xf32>
    %188 = tpu.matmul %186, %187, %cst_68 {dimension_numbers = #tpu.dot_dimension_numbers<[1], [1], [0], [0], [0, 0, 1, 0], [], []>} : vector<32x256xbf16>, vector<128x256xbf16>, vector<32x128xf32> -> vector<32x128xf32>
    %c0_69 = arith.constant 0 : index
    %c0_70 = arith.constant 0 : index
    %189 = vector.load %arg13[%c0_69, %c0_70] : memref<1x128xf32, #tpu.memory_space<vmem>>, vector<1x128xf32>
    %190 = vector.broadcast %189 : vector<1x128xf32> to vector<32x128xf32>
    %191 = arith.addf %188, %190 : vector<32x128xf32>
    %192 = arith.addf %155, %191 : vector<32x128xf32>
    %193 = vector.shape_cast %192 : vector<32x128xf32> to vector<2x16x128xf32>
    %c0_71 = arith.constant 0 : index
    %c0_72 = arith.constant 0 : index
    %c0_73 = arith.constant 0 : index
    %194 = vector.load %arg14[%c0_71, %c0_72, %c0_73] : memref<2x16x128xf32, #tpu.memory_space<vmem>>, vector<2x16x128xf32>
    tpu.vector_store %arg14[%c0_71, %c0_72, %c0_73], %193 {strides = array<i32>} : memref<2x16x128xf32, #tpu.memory_space<vmem>>, vector<2x16x128xf32>,
    return
  }
  func.func @transform_0(%arg0: i32) -> (i32, i32, i32) {
    %c0_i32 = arith.constant 0 : i32
    %c0_i32_0 = arith.constant 0 : i32
    %c0_i32_1 = arith.constant 0 : i32
    return %arg0, %c0_i32, %c0_i32_0 : i32, i32, i32
  }
  func.func @transform_1(%arg0: i32) -> (i32, i32) {
    %c0_i32 = arith.constant 0 : i32
    %c0_i32_0 = arith.constant 0 : i32
    %c0_i32_1 = arith.constant 0 : i32
    return %c0_i32, %c0_i32_0 : i32, i32
  }
  func.func @transform_2(%arg0: i32) -> (i32, i32) {
    %c0_i32 = arith.constant 0 : i32
    %c0_i32_0 = arith.constant 0 : i32
    %c0_i32_1 = arith.constant 0 : i32
    return %c0_i32, %c0_i32_0 : i32, i32
  }
  func.func @transform_3(%arg0: i32) -> (i32, i32) {
    %c0_i32 = arith.constant 0 : i32
    %c0_i32_0 = arith.constant 0 : i32
    %c0_i32_1 = arith.constant 0 : i32
    return %c0_i32, %c0_i32_0 : i32, i32
  }
  func.func @transform_4(%arg0: i32) -> (i32, i32) {
    %c0_i32 = arith.constant 0 : i32
    %c0_i32_0 = arith.constant 0 : i32
    %c0_i32_1 = arith.constant 0 : i32
    return %c0_i32, %c0_i32_0 : i32, i32
  }
  func.func @transform_5(%arg0: i32) -> (i32, i32) {
    %c0_i32 = arith.constant 0 : i32
    %c0_i32_0 = arith.constant 0 : i32
    %c0_i32_1 = arith.constant 0 : i32
    return %c0_i32, %c0_i32_0 : i32, i32
  }
  func.func @transform_6(%arg0: i32) -> (i32, i32) {
    %c0_i32 = arith.constant 0 : i32
    %c0_i32_0 = arith.constant 0 : i32
    %c0_i32_1 = arith.constant 0 : i32
    return %c0_i32, %c0_i32_0 : i32, i32
  }
  func.func @transform_7(%arg0: i32) -> (i32, i32) {
    %c0_i32 = arith.constant 0 : i32
    %c0_i32_0 = arith.constant 0 : i32
    %c0_i32_1 = arith.constant 0 : i32
    return %c0_i32, %c0_i32_0 : i32, i32
  }
  func.func @transform_8(%arg0: i32) -> (i32, i32) {
    %c0_i32 = arith.constant 0 : i32
    %c0_i32_0 = arith.constant 0 : i32
    %c0_i32_1 = arith.constant 0 : i32
    return %c0_i32, %c0_i32_0 : i32, i32
  }
  func.func @transform_9(%arg0: i32) -> (i32, i32) {
    %c0_i32 = arith.constant 0 : i32
    %c0_i32_0 = arith.constant 0 : i32
    %c0_i32_1 = arith.constant 0 : i32
    return %c0_i32, %c0_i32_0 : i32, i32
  }
  func.func @transform_10(%arg0: i32) -> (i32, i32) {
    %c0_i32 = arith.constant 0 : i32
    %c0_i32_0 = arith.constant 0 : i32
    %c0_i32_1 = arith.constant 0 : i32
    return %c0_i32, %c0_i32_0 : i32, i32
  }
  func.func @transform_11(%arg0: i32) -> (i32, i32) {
    %c0_i32 = arith.constant 0 : i32
    %c0_i32_0 = arith.constant 0 : i32
    %c0_i32_1 = arith.constant 0 : i32
    return %c0_i32, %c0_i32_0 : i32, i32
  }
  func.func @transform_12(%arg0: i32) -> (i32, i32) {
    %c0_i32 = arith.constant 0 : i32
    %c0_i32_0 = arith.constant 0 : i32
    %c0_i32_1 = arith.constant 0 : i32
    return %c0_i32, %c0_i32_0 : i32, i32
  }
  func.func @transform_13(%arg0: i32) -> (i32, i32, i32) {
    %c0_i32 = arith.constant 0 : i32
    %c0_i32_0 = arith.constant 0 : i32
    %c0_i32_1 = arith.constant 0 : i32
    return %arg0, %c0_i32, %c0_i32_0 : i32, i32, i32
  }
}

</mosaic_0001>

<llo_original>
// kernel: tpu_custom_call.1
$region0: #{tpu_custom_call.1}
  #allocation0 [shape = 'u32[]', space=smem, size = 0x4, offset = 0x4, fixed_abs, tag = 'smem constant byte address 0x4 - core index']
  #allocation1 [shape = 'u32[72,128]{1,0:T(1,128)}', space=vmem, size = 0x9000, scoped, tag = 'internal scratch']
  %s0 = inlined_call_operand.hbm [shape: f32[4,16,128], index: 0, kind: input, shape index: {}]
  %s1 = inlined_call_operand.hbm [shape: f32[1,128], index: 1, kind: input, shape index: {}]
  %s2 = inlined_call_operand.hbm [shape: f32[1,128], index: 2, kind: input, shape index: {}]
  %s3 = inlined_call_operand.hbm [shape: bf16[384,128], index: 3, kind: input, shape index: {}]
  %s4 = inlined_call_operand.vmem [shape: f32[1,384], index: 4, kind: input, shape index: {}]
  %s5 = inlined_call_operand.hbm [shape: bf16[128,128], index: 5, kind: input, shape index: {}]
  %s6 = inlined_call_operand.hbm [shape: f32[1,128], index: 6, kind: input, shape index: {}]
  %s7 = inlined_call_operand.vmem [shape: f32[1,128], index: 7, kind: input, shape index: {}]
  %s8 = inlined_call_operand.vmem [shape: f32[1,128], index: 8, kind: input, shape index: {}]
  %s9 = inlined_call_operand.hbm [shape: bf16[256,128], index: 9, kind: input, shape index: {}]
  %s10 = inlined_call_operand.vmem [shape: f32[1,256], index: 10, kind: input, shape index: {}]
  %s11 = inlined_call_operand.hbm [shape: bf16[128,256], index: 11, kind: input, shape index: {}]
  %s12 = inlined_call_operand.vmem [shape: f32[1,128], index: 12, kind: input, shape index: {}]
  %s13 = inlined_call_operand.hbm [shape: f32[4,16,128], index: 13, kind: output, shape index: {}]
  %s14 = sld [smem:[#allocation0]]
  $region117: #{tpu_custom_call.1} parent=0
    _
  %s16 = ssub.s32 1, %s14
  %s17 = scalar_select 0, %s16, %s14
  $region1: #{tpu_custom_call.1} parent=0
    #allocation2 [shape = 'u8[32768]{0}', space=vmem, size = 0x8000, scoped, tag = 'input window, operand 0']
    #allocation3 [shape = 's32[2]{0}', space=sflag, size = 0x8, scoped, tag = 'scoped memory for tpu_custom_call.1']
    #allocation4 [shape = 's32[2]{0}', space=sflag, size = 0x8, scoped, tag = 'scoped memory for tpu_custom_call.1']
    #allocation5 [shape = 'u8[512]{0}', space=vmem, size = 0x400, scoped, tag = 'input window, operand 1, single buffered']
    #allocation6 [shape = 's32[1]{0}', space=sflag, size = 0x4, scoped, tag = 'scoped memory for tpu_custom_call.1']
    #allocation7 [shape = 'u8[512]{0}', space=vmem, size = 0x400, scoped, tag = 'input window, operand 2, single buffered']
    #allocation8 [shape = 'u8[98304]{0}', space=vmem, size = 0x18000, scoped, tag = 'input window, operand 3, single buffered']
    #allocation9 [shape = 's32[1]{0}', space=sflag, size = 0x4, scoped, tag = 'scoped memory for tpu_custom_call.1']
    #allocation10 [shape = 'u8[32768]{0}', space=vmem, size = 0x8000, scoped, tag = 'input window, operand 5, single buffered']
    #allocation11 [shape = 'u8[512]{0}', space=vmem, size = 0x400, scoped, tag = 'input window, operand 6, single buffered']
    #allocation12 [shape = 's32[1]{0}', space=sflag, size = 0x4, scoped, tag = 'scoped memory for tpu_custom_call.1']
    #allocation13 [shape = 'u8[65536]{0}', space=vmem, size = 0x10000, scoped, tag = 'input window, operand 9, single buffered']
    #allocation14 [shape = 'u8[65536]{0}', space=vmem, size = 0x10000, scoped, tag = 'input window, operand 11, single buffered']
    #allocation15 [shape = 's32[1]{0}', space=sflag, size = 0x4, scoped, tag = 'scoped memory for tpu_custom_call.1']
    #allocation16 [shape = 'u8[32768]{0}', space=vmem, size = 0x8000, scoped, tag = 'output window, operand 0']
    %18 = vsyncpa [#allocation3], 0
    %s19 = scalar_lea.sflag [#allocation3], 1
    %20 = vsyncpa %s19, 0
    %21 = vsyncpa [#allocation6], 0
    %22 = vsyncpa [#allocation9], 0
    %23 = vsyncpa [#allocation12], 0
    %24 = vsyncpa [#allocation15], 0
    %25 = vsyncpa [#allocation4], 0
    %s26 = scalar_lea.sflag [#allocation4], 1
    %27 = vsyncpa %s26, 0
    loop: start=0, step=1, limit=4
    $region2: #{tpu_custom_call.1} parent=1 // loop_pre_header
      _
    $region3: #{tpu_custom_call.1} parent=1 // loop_header
      %s29 = sphi 0, %s33
      %p30 = scmp.ge.s32.totalorder %s29, 4
      %s39 = sphi 0, %s41
      %s42 = sphi 0, %s39
      %s43 = sphi 0, %s42
      %s59 = sphi 0, %s43
      %s63 = sphi 0, %s63
      %s65 = sphi 0, %s63
      %s66 = sphi 0, %s65
      %s80 = sphi 0, %s66
      %s84 = sphi 0, %s84
      %s86 = sphi 0, %s84
      %s87 = sphi 0, %s86
      %s101 = sphi 0, %s87
      %s105 = sphi 0, %s105
      %s107 = sphi 0, %s105
      %s108 = sphi 0, %s107
      %s122 = sphi 0, %s108
      %s126 = sphi 0, %s126
      %s128 = sphi 0, %s126
      %s129 = sphi 0, %s128
      %s143 = sphi 0, %s129
      %s147 = sphi 0, %s147
      %s149 = sphi 0, %s147
      %s150 = sphi 0, %s149
      %s164 = sphi 0, %s150
      %s168 = sphi 0, %s168
      %s170 = sphi 0, %s168
      %s171 = sphi 0, %s170
      %s185 = sphi 0, %s171
      %s189 = sphi 0, %s189
      %s191 = sphi 0, %s189
      %s192 = sphi 0, %s191
      %s206 = sphi 0, %s192
      %s210 = sphi 0, %s210
      %s212 = sphi 0, %s210
      %s213 = sphi 0, %s212
      %s227 = sphi 0, %s213
      %s231 = sphi 0, %s231
      %s233 = sphi 0, %s231
      %s234 = sphi 0, %s233
      %s248 = sphi 0, %s234
      %s252 = sphi 0, %s252
      %s254 = sphi 0, %s252
      %s255 = sphi 0, %s254
      %s269 = sphi 0, %s255
      %s273 = sphi 0, %s273
      %s275 = sphi 0, %s273
      %s276 = sphi 0, %s275
      %s290 = sphi 0, %s276
      %s294 = sphi 0, %s294
      %s296 = sphi 0, %s294
      %s297 = sphi 0, %s296
      %s311 = sphi 0, %s297
      %s317 = sphi 0, %s319
      %s320 = sphi 0, %s317
      %s321 = sphi 0, %s320
      %s337 = sphi 0, %s321
    $region4: #{tpu_custom_call.1} parent=1 // loop_header_branch
      %32 = sbr.rel (%p30) target = $region8
    $region5: #{tpu_custom_call.1} parent=1 // loop_body
      %s34 = ssub.s32 %s29, 1
      %s35 = ssub.s32 %s29, 2
      %s36 = sadd.s32 %s29, 1
      %s37 = ssub.s32 %s29, %s36
      %p38 = scmp.eq.s32.totalorder %s37, 0
      %s40 = sadd.s32 %s39, 1
      %s41 = scalar_select %p38, %s39, %s40
      %p44 = pneg %p38
      %p45 = scmp.eq.s32.totalorder %s29, 1
      %p46 = por %p44, %p45
      %p47 = scmp.ne.s32.totalorder %s39, %s42
      %p48 = scmp.eq.s32.totalorder %s29, 0
      %p49 = por %p47, %p48
      %p50 = scmp.ne.s32.totalorder %s39, %s42
      %p51 = scmp.eq.s32.totalorder %s34, 1
      %p52 = por %p50, %p51
      %p53 = scmp.ne.s32.totalorder %s42, %s43
      %p54 = scmp.eq.s32.totalorder %s34, 0
      %p55 = por %p53, %p54
      %p56 = scmp.ne.s32.totalorder %s42, %s43
      %p57 = scmp.eq.s32.totalorder %s35, 1
      %p58 = por %p56, %p57
      %p60 = scmp.ne.s32.totalorder %s43, %s59
      %p61 = scmp.eq.s32.totalorder %s35, 0
      %p62 = por %p60, %p61
      %s64 = sadd.s32 %s63, 1
      %p67 = scmp.eq.s32.totalorder %s29, 1
      %p68 = scmp.ne.s32.totalorder %s63, %s65
      %p69 = scmp.eq.s32.totalorder %s29, 0
      %p70 = por %p68, %p69
      %p71 = scmp.ne.s32.totalorder %s63, %s65
      %p72 = scmp.eq.s32.totalorder %s34, 1
      %p73 = por %p71, %p72
      %p74 = scmp.ne.s32.totalorder %s65, %s66
      %p75 = scmp.eq.s32.totalorder %s34, 0
      %p76 = por %p74, %p75
      %p77 = scmp.ne.s32.totalorder %s65, %s66
      %p78 = scmp.eq.s32.totalorder %s35, 1
      %p79 = por %p77, %p78
      %p81 = scmp.ne.s32.totalorder %s66, %s80
      %p82 = scmp.eq.s32.totalorder %s35, 0
      %p83 = por %p81, %p82
      %s85 = sadd.s32 %s84, 1
      %p88 = scmp.eq.s32.totalorder %s29, 1
      %p89 = scmp.ne.s32.totalorder %s84, %s86
      %p90 = scmp.eq.s32.totalorder %s29, 0
      %p91 = por %p89, %p90
      %p92 = scmp.ne.s32.totalorder %s84, %s86
      %p93 = scmp.eq.s32.totalorder %s34, 1
      %p94 = por %p92, %p93
      %p95 = scmp.ne.s32.totalorder %s86, %s87
      %p96 = scmp.eq.s32.totalorder %s34, 0
      %p97 = por %p95, %p96
      %p98 = scmp.ne.s32.totalorder %s86, %s87
      %p99 = scmp.eq.s32.totalorder %s35, 1
      %p100 = por %p98, %p99
      %p102 = scmp.ne.s32.totalorder %s87, %s101
      %p103 = scmp.eq.s32.totalorder %s35, 0
      %p104 = por %p102, %p103
      %s106 = sadd.s32 %s105, 1
      %p109 = scmp.eq.s32.totalorder %s29, 1
      %p110 = scmp.ne.s32.totalorder %s105, %s107
      %p111 = scmp.eq.s32.totalorder %s29, 0
      %p112 = por %p110, %p111
      %p113 = scmp.ne.s32.totalorder %s105, %s107
      %p114 = scmp.eq.s32.totalorder %s34, 1
      %p115 = por %p113, %p114
      %p116 = scmp.ne.s32.totalorder %s107, %s108
      %p117 = scmp.eq.s32.totalorder %s34, 0
      %p118 = por %p116, %p117
      %p119 = scmp.ne.s32.totalorder %s107, %s108
      %p120 = scmp.eq.s32.totalorder %s35, 1
      %p121 = por %p119, %p120
      %p123 = scmp.ne.s32.totalorder %s108, %s122
      %p124 = scmp.eq.s32.totalorder %s35, 0
      %p125 = por %p123, %p124
      %s127 = sadd.s32 %s126, 1
      %p130 = scmp.eq.s32.totalorder %s29, 1
      %p131 = scmp.ne.s32.totalorder %s126, %s128
      %p132 = scmp.eq.s32.totalorder %s29, 0
      %p133 = por %p131, %p132
      %p134 = scmp.ne.s32.totalorder %s126, %s128
      %p135 = scmp.eq.s32.totalorder %s34, 1
      %p136 = por %p134, %p135
      %p137 = scmp.ne.s32.totalorder %s128, %s129
      %p138 = scmp.eq.s32.totalorder %s34, 0
      %p139 = por %p137, %p138
      %p140 = scmp.ne.s32.totalorder %s128, %s129
      %p141 = scmp.eq.s32.totalorder %s35, 1
      %p142 = por %p140, %p141
      %p144 = scmp.ne.s32.totalorder %s129, %s143
      %p145 = scmp.eq.s32.totalorder %s35, 0
      %p146 = por %p144, %p145
      %s148 = sadd.s32 %s147, 1
      %p151 = scmp.eq.s32.totalorder %s29, 1
      %p152 = scmp.ne.s32.totalorder %s147, %s149
      %p153 = scmp.eq.s32.totalorder %s29, 0
      %p154 = por %p152, %p153
      %p155 = scmp.ne.s32.totalorder %s147, %s149
      %p156 = scmp.eq.s32.totalorder %s34, 1
      %p157 = por %p155, %p156
      %p158 = scmp.ne.s32.totalorder %s149, %s150
      %p159 = scmp.eq.s32.totalorder %s34, 0
      %p160 = por %p158, %p159
      %p161 = scmp.ne.s32.totalorder %s149, %s150
      %p162 = scmp.eq.s32.totalorder %s35, 1
      %p163 = por %p161, %p162
      %p165 = scmp.ne.s32.totalorder %s150, %s164
      %p166 = scmp.eq.s32.totalorder %s35, 0
      %p167 = por %p165, %p166
      %s169 = sadd.s32 %s168, 1
      %p172 = scmp.eq.s32.totalorder %s29, 1
      %p173 = scmp.ne.s32.totalorder %s168, %s170
      %p174 = scmp.eq.s32.totalorder %s29, 0
      %p175 = por %p173, %p174
      %p176 = scmp.ne.s32.totalorder %s168, %s170
      %p177 = scmp.eq.s32.totalorder %s34, 1
      %p178 = por %p176, %p177
      %p179 = scmp.ne.s32.totalorder %s170, %s171
      %p180 = scmp.eq.s32.totalorder %s34, 0
      %p181 = por %p179, %p180
      %p182 = scmp.ne.s32.totalorder %s170, %s171
      %p183 = scmp.eq.s32.totalorder %s35, 1
      %p184 = por %p182, %p183
      %p186 = scmp.ne.s32.totalorder %s171, %s185
      %p187 = scmp.eq.s32.totalorder %s35, 0
      %p188 = por %p186, %p187
      %s190 = sadd.s32 %s189, 1
      %p193 = scmp.eq.s32.totalorder %s29, 1
      %p194 = scmp.ne.s32.totalorder %s189, %s191
      %p195 = scmp.eq.s32.totalorder %s29, 0
      %p196 = por %p194, %p195
      %p197 = scmp.ne.s32.totalorder %s189, %s191
      %p198 = scmp.eq.s32.totalorder %s34, 1
      %p199 = por %p197, %p198
      %p200 = scmp.ne.s32.totalorder %s191, %s192
      %p201 = scmp.eq.s32.totalorder %s34, 0
      %p202 = por %p200, %p201
      %p203 = scmp.ne.s32.totalorder %s191, %s192
      %p204 = scmp.eq.s32.totalorder %s35, 1
      %p205 = por %p203, %p204
      %p207 = scmp.ne.s32.totalorder %s192, %s206
      %p208 = scmp.eq.s32.totalorder %s35, 0
      %p209 = por %p207, %p208
      %s211 = sadd.s32 %s210, 1
      %p214 = scmp.eq.s32.totalorder %s29, 1
      %p215 = scmp.ne.s32.totalorder %s210, %s212
      %p216 = scmp.eq.s32.totalorder %s29, 0
      %p217 = por %p215, %p216
      %p218 = scmp.ne.s32.totalorder %s210, %s212
      %p219 = scmp.eq.s32.totalorder %s34, 1
      %p220 = por %p218, %p219
      %p221 = scmp.ne.s32.totalorder %s212, %s213
      %p222 = scmp.eq.s32.totalorder %s34, 0
      %p223 = por %p221, %p222
      %p224 = scmp.ne.s32.totalorder %s212, %s213
      %p225 = scmp.eq.s32.totalorder %s35, 1
      %p226 = por %p224, %p225
      %p228 = scmp.ne.s32.totalorder %s213, %s227
      %p229 = scmp.eq.s32.totalorder %s35, 0
      %p230 = por %p228, %p229
      %s232 = sadd.s32 %s231, 1
      %p235 = scmp.eq.s32.totalorder %s29, 1
      %p236 = scmp.ne.s32.totalorder %s231, %s233
      %p237 = scmp.eq.s32.totalorder %s29, 0
      %p238 = por %p236, %p237
      %p239 = scmp.ne.s32.totalorder %s231, %s233
      %p240 = scmp.eq.s32.totalorder %s34, 1
      %p241 = por %p239, %p240
      %p242 = scmp.ne.s32.totalorder %s233, %s234
      %p243 = scmp.eq.s32.totalorder %s34, 0
      %p244 = por %p242, %p243
      %p245 = scmp.ne.s32.totalorder %s233, %s234
      %p246 = scmp.eq.s32.totalorder %s35, 1
      %p247 = por %p245, %p246
      %p249 = scmp.ne.s32.totalorder %s234, %s248
      %p250 = scmp.eq.s32.totalorder %s35, 0
      %p251 = por %p249, %p250
      %s253 = sadd.s32 %s252, 1
      %p256 = scmp.eq.s32.totalorder %s29, 1
      %p257 = scmp.ne.s32.totalorder %s252, %s254
      %p258 = scmp.eq.s32.totalorder %s29, 0
      %p259 = por %p257, %p258
      %p260 = scmp.ne.s32.totalorder %s252, %s254
      %p261 = scmp.eq.s32.totalorder %s34, 1
      %p262 = por %p260, %p261
      %p263 = scmp.ne.s32.totalorder %s254, %s255
      %p264 = scmp.eq.s32.totalorder %s34, 0
      %p265 = por %p263, %p264
      %p266 = scmp.ne.s32.totalorder %s254, %s255
      %p267 = scmp.eq.s32.totalorder %s35, 1
      %p268 = por %p266, %p267
      %p270 = scmp.ne.s32.totalorder %s255, %s269
      %p271 = scmp.eq.s32.totalorder %s35, 0
      %p272 = por %p270, %p271
      %s274 = sadd.s32 %s273, 1
      %p277 = scmp.eq.s32.totalorder %s29, 1
      %p278 = scmp.ne.s32.totalorder %s273, %s275
      %p279 = scmp.eq.s32.totalorder %s29, 0
      %p280 = por %p278, %p279
      %p281 = scmp.ne.s32.totalorder %s273, %s275
      %p282 = scmp.eq.s32.totalorder %s34, 1
      %p283 = por %p281, %p282
      %p284 = scmp.ne.s32.totalorder %s275, %s276
      %p285 = scmp.eq.s32.totalorder %s34, 0
      %p286 = por %p284, %p285
      %p287 = scmp.ne.s32.totalorder %s275, %s276
      %p288 = scmp.eq.s32.totalorder %s35, 1
      %p289 = por %p287, %p288
      %p291 = scmp.ne.s32.totalorder %s276, %s290
      %p292 = scmp.eq.s32.totalorder %s35, 0
      %p293 = por %p291, %p292
      %s295 = sadd.s32 %s294, 1
      %p298 = scmp.eq.s32.totalorder %s29, 1
      %p299 = scmp.ne.s32.totalorder %s294, %s296
      %p300 = scmp.eq.s32.totalorder %s29, 0
      %p301 = por %p299, %p300
      %p302 = scmp.ne.s32.totalorder %s294, %s296
      %p303 = scmp.eq.s32.totalorder %s34, 1
      %p304 = por %p302, %p303
      %p305 = scmp.ne.s32.totalorder %s296, %s297
      %p306 = scmp.eq.s32.totalorder %s34, 0
      %p307 = por %p305, %p306
      %p308 = scmp.ne.s32.totalorder %s296, %s297
      %p309 = scmp.eq.s32.totalorder %s35, 1
      %p310 = por %p308, %p309
      %p312 = scmp.ne.s32.totalorder %s297, %s311
      %p313 = scmp.eq.s32.totalorder %s35, 0
      %p314 = por %p312, %p313
      %s315 = ssub.s32 %s29, %s36
      %p316 = scmp.eq.s32.totalorder %s315, 0
      %s318 = sadd.s32 %s317, 1
      %s319 = scalar_select %p316, %s317, %s318
      %p322 = pneg %p316
      %p323 = scmp.eq.s32.totalorder %s29, 1
      %p324 = por %p322, %p323
      %p325 = scmp.ne.s32.totalorder %s317, %s320
      %p326 = scmp.eq.s32.totalorder %s29, 0
      %p327 = por %p325, %p326
      %p328 = scmp.ne.s32.totalorder %s317, %s320
      %p329 = scmp.eq.s32.totalorder %s34, 1
      %p330 = por %p328, %p329
      %p331 = scmp.ne.s32.totalorder %s320, %s321
      %p332 = scmp.eq.s32.totalorder %s34, 0
      %p333 = por %p331, %p332
      %p334 = scmp.ne.s32.totalorder %s320, %s321
      %p335 = scmp.eq.s32.totalorder %s35, 1
      %p336 = por %p334, %p335
      %p338 = scmp.ne.s32.totalorder %s321, %s337
      %p339 = scmp.eq.s32.totalorder %s35, 0
      %p340 = por %p338, %p339
      %p341 = scmp.le.s32.totalorder 1, %s29
      %p342 = scmp.lt.s32.totalorder %s29, 3
      %p343 = pnand %p341, %p342
      %p344 = pneg %p343
      // Predicated region
      $region9: #{tpu_custom_call.1} parent=5 // pred_check
        _
      $region10: #{tpu_custom_call.1} parent=5 // pred_check_branch
        %346 = sbr.rel (%p343) target = $region12
      $region11: #{tpu_custom_call.1} parent=5 // pred_region
        %s347 = ssub.s32 %s29, 1
        // Predicated region
        $region13: #{tpu_custom_call.1} parent=11 // pred_check
          %p348 = pneg %p76
        $region14: #{tpu_custom_call.1} parent=11 // pred_check_branch
          %350 = sbr.rel (%p348) target = $region16
        $region15: #{tpu_custom_call.1} parent=11 // pred_region
          %352 = vsyncadd [#allocation6], 0
          %s354 = sshll.u32 %s1, 4
          %s355 = int_to_ptr.hbm [resolvable:$true] %s354
          %s356 = sshll.u32 [#allocation5], 4
          %s357 = int_to_ptr.vmem [resolvable:$true] %s356
          %359 = dma.hbm_to_vmem [thread:$0]  %s355, 16, %s357, [#allocation6]
        $region16: #{tpu_custom_call.1} parent=11 // pred_fallthru
          _
        // Predicated region
        $region17: #{tpu_custom_call.1} parent=11 // pred_check
          %p360 = pneg %p97
        $region18: #{tpu_custom_call.1} parent=11 // pred_check_branch
          %362 = sbr.rel (%p360) target = $region20
        $region19: #{tpu_custom_call.1} parent=11 // pred_region
          %364 = vsyncadd [#allocation6], 0
          %s366 = sshll.u32 %s2, 4
          %s367 = int_to_ptr.hbm [resolvable:$true] %s366
          %s368 = sshll.u32 [#allocation7], 4
          %s369 = int_to_ptr.vmem [resolvable:$true] %s368
          %371 = dma.hbm_to_vmem [thread:$0]  %s367, 16, %s369, [#allocation6]
        $region20: #{tpu_custom_call.1} parent=11 // pred_fallthru
          _
        // Predicated region
        $region21: #{tpu_custom_call.1} parent=11 // pred_check
          %p372 = pneg %p118
        $region22: #{tpu_custom_call.1} parent=11 // pred_check_branch
          %374 = sbr.rel (%p372) target = $region24
        $region23: #{tpu_custom_call.1} parent=11 // pred_region
          %376 = vsyncadd [#allocation9], 0
          %s377 = sshll.u32 %s3, 4
          %s378 = int_to_ptr.hbm [resolvable:$true] %s377
          %s379 = sshll.u32 [#allocation8], 4
          %s380 = int_to_ptr.vmem [resolvable:$true] %s379
          %385 = dma.hbm_to_vmem [thread:$0]  %s378, 3072, %s380, [#allocation9], 64, 64, 4
        $region24: #{tpu_custom_call.1} parent=11 // pred_fallthru
          _
        // Predicated region
        $region25: #{tpu_custom_call.1} parent=11 // pred_check
          %p386 = pneg %p139
        $region26: #{tpu_custom_call.1} parent=11 // pred_check_branch
          %388 = sbr.rel (%p386) target = $region28
        $region27: #{tpu_custom_call.1} parent=11 // pred_region
          _
        $region28: #{tpu_custom_call.1} parent=11 // pred_fallthru
          _
        // Predicated region
        $region29: #{tpu_custom_call.1} parent=11 // pred_check
          %p389 = pneg %p160
        $region30: #{tpu_custom_call.1} parent=11 // pred_check_branch
          %391 = sbr.rel (%p389) target = $region32
        $region31: #{tpu_custom_call.1} parent=11 // pred_region
          %393 = vsyncadd [#allocation9], 0
          %s394 = sshll.u32 %s5, 4
          %s395 = int_to_ptr.hbm [resolvable:$true] %s394
          %s396 = sshll.u32 [#allocation10], 4
          %s397 = int_to_ptr.vmem [resolvable:$true] %s396
          %402 = dma.hbm_to_vmem [thread:$0]  %s395, 1024, %s397, [#allocation9], 64, 64, 4
        $region32: #{tpu_custom_call.1} parent=11 // pred_fallthru
          _
        // Predicated region
        $region33: #{tpu_custom_call.1} parent=11 // pred_check
          %p403 = pneg %p181
        $region34: #{tpu_custom_call.1} parent=11 // pred_check_branch
          %405 = sbr.rel (%p403) target = $region36
        $region35: #{tpu_custom_call.1} parent=11 // pred_region
          %407 = vsyncadd [#allocation12], 0
          %s409 = sshll.u32 %s6, 4
          %s410 = int_to_ptr.hbm [resolvable:$true] %s409
          %s411 = sshll.u32 [#allocation11], 4
          %s412 = int_to_ptr.vmem [resolvable:$true] %s411
          %414 = dma.hbm_to_vmem [thread:$0]  %s410, 16, %s412, [#allocation12]
        $region36: #{tpu_custom_call.1} parent=11 // pred_fallthru
          _
        // Predicated region
        $region37: #{tpu_custom_call.1} parent=11 // pred_check
          %p415 = pneg %p202
        $region38: #{tpu_custom_call.1} parent=11 // pred_check_branch
          %417 = sbr.rel (%p415) target = $region40
        $region39: #{tpu_custom_call.1} parent=11 // pred_region
          _
        $region40: #{tpu_custom_call.1} parent=11 // pred_fallthru
          _
        // Predicated region
        $region41: #{tpu_custom_call.1} parent=11 // pred_check
          %p418 = pneg %p223
        $region42: #{tpu_custom_call.1} parent=11 // pred_check_branch
          %420 = sbr.rel (%p418) target = $region44
        $region43: #{tpu_custom_call.1} parent=11 // pred_region
          _
        $region44: #{tpu_custom_call.1} parent=11 // pred_fallthru
          _
        // Predicated region
        $region45: #{tpu_custom_call.1} parent=11 // pred_check
          %p421 = pneg %p244
        $region46: #{tpu_custom_call.1} parent=11 // pred_check_branch
          %423 = sbr.rel (%p421) target = $region48
        $region47: #{tpu_custom_call.1} parent=11 // pred_region
          %425 = vsyncadd [#allocation12], 0
          %s426 = sshll.u32 %s9, 4
          %s427 = int_to_ptr.hbm [resolvable:$true] %s426
          %s428 = sshll.u32 [#allocation13], 4
          %s429 = int_to_ptr.vmem [resolvable:$true] %s428
          %434 = dma.hbm_to_vmem [thread:$0]  %s427, 2048, %s429, [#allocation12], 64, 64, 4
        $region48: #{tpu_custom_call.1} parent=11 // pred_fallthru
          _
        // Predicated region
        $region49: #{tpu_custom_call.1} parent=11 // pred_check
          %p435 = pneg %p265
        $region50: #{tpu_custom_call.1} parent=11 // pred_check_branch
          %437 = sbr.rel (%p435) target = $region52
        $region51: #{tpu_custom_call.1} parent=11 // pred_region
          _
        $region52: #{tpu_custom_call.1} parent=11 // pred_fallthru
          _
        // Predicated region
        $region53: #{tpu_custom_call.1} parent=11 // pred_check
          %p438 = pneg %p286
        $region54: #{tpu_custom_call.1} parent=11 // pred_check_branch
          %440 = sbr.rel (%p438) target = $region56
        $region55: #{tpu_custom_call.1} parent=11 // pred_region
          %442 = vsyncadd [#allocation15], 0
          %s443 = sshll.u32 %s11, 4
          %s444 = int_to_ptr.hbm [resolvable:$true] %s443
          %s445 = sshll.u32 [#allocation14], 4
          %s446 = int_to_ptr.vmem [resolvable:$true] %s445
          %451 = dma.hbm_to_vmem [thread:$0]  %s444, 2048, %s446, [#allocation15], 128, 128, 8
        $region56: #{tpu_custom_call.1} parent=11 // pred_fallthru
          _
        // Predicated region
        $region57: #{tpu_custom_call.1} parent=11 // pred_check
          %p452 = pneg %p307
        $region58: #{tpu_custom_call.1} parent=11 // pred_check_branch
          %454 = sbr.rel (%p452) target = $region60
        $region59: #{tpu_custom_call.1} parent=11 // pred_region
          _
        $region60: #{tpu_custom_call.1} parent=11 // pred_fallthru
          _
      $region12: #{tpu_custom_call.1} parent=5 // pred_fallthru
        _
      %p455 = scmp.lt.s32.totalorder %s29, 2
      // Predicated region
      $region61: #{tpu_custom_call.1} parent=5 // pred_check
        %p456 = pneg %p455
      $region62: #{tpu_custom_call.1} parent=5 // pred_check_branch
        %458 = sbr.rel (%p456) target = $region64
      $region63: #{tpu_custom_call.1} parent=5 // pred_region
        // Predicated region
        $region65: #{tpu_custom_call.1} parent=63 // pred_check
          %p459 = pneg %p49
        $region66: #{tpu_custom_call.1} parent=63 // pred_check_branch
          %461 = sbr.rel (%p459) target = $region68
        $region67: #{tpu_custom_call.1} parent=63 // pred_region
          %s462 = sand.u32 %s39, 1
          %s463 = scalar_lea.sflag [#allocation3], %s462
          %s464 = sand.u32 %s39, 1
          %s465 = smul.addr %s464, 32
          %s466 = scalar_lea.vmem [#allocation2], %s465
          %s467 = smul.u32 2, %s29
          %469 = vsyncadd %s463, 0
          %s470 = smul.addr %s467, 2
          %s471 = smul.addr %s470, 8
          %s472 = scalar_lea.hbm %s0, %s471
          %s473 = sshll.u32 %s472, 4
          %s474 = int_to_ptr.hbm [resolvable:$true] %s473
          %s475 = sshll.u32 %s466, 4
          %s476 = int_to_ptr.vmem [resolvable:$true] %s475
          %481 = dma.hbm_to_vmem [thread:$0]  %s474, 512, %s476, %s463, 128, 128, 8
        $region68: #{tpu_custom_call.1} parent=63 // pred_fallthru
          _
      $region64: #{tpu_custom_call.1} parent=5 // pred_fallthru
        _
      %p482 = scmp.le.s32.totalorder 1, %s29
      %p483 = scmp.lt.s32.totalorder %s29, 3
      %p484 = pnand %p482, %p483
      %p485 = pneg %p484
      // Predicated region
      $region69: #{tpu_custom_call.1} parent=5 // pred_check
        _
      $region70: #{tpu_custom_call.1} parent=5 // pred_check_branch
        %487 = sbr.rel (%p484) target = $region72
      $region71: #{tpu_custom_call.1} parent=5 // pred_region
        %s488 = ssub.s32 %s29, 1
        %s489 = sand.u32 %s42, 1
        %s490 = scalar_lea.sflag [#allocation3], %s489
        %s491 = sand.u32 %s42, 1
        %s492 = smul.addr %s491, 32
        %s493 = scalar_lea.vmem [#allocation2], %s492
        // Predicated region
        $region73: #{tpu_custom_call.1} parent=71 // pred_check
          %p494 = pneg %p55
        $region74: #{tpu_custom_call.1} parent=71 // pred_check_branch
          %496 = sbr.rel (%p494) target = $region76
        $region75: #{tpu_custom_call.1} parent=71 // pred_region
          %498 = dma.done %s490, 512
        $region76: #{tpu_custom_call.1} parent=71 // pred_fallthru
          _
        // Predicated region
        $region77: #{tpu_custom_call.1} parent=71 // pred_check
          %p499 = pneg %p76
        $region78: #{tpu_custom_call.1} parent=71 // pred_check_branch
          %501 = sbr.rel (%p499) target = $region80
        $region79: #{tpu_custom_call.1} parent=71 // pred_region
          %503 = dma.done [#allocation6], 16
        $region80: #{tpu_custom_call.1} parent=71 // pred_fallthru
          _
        // Predicated region
        $region81: #{tpu_custom_call.1} parent=71 // pred_check
          %p504 = pneg %p97
        $region82: #{tpu_custom_call.1} parent=71 // pred_check_branch
          %506 = sbr.rel (%p504) target = $region84
        $region83: #{tpu_custom_call.1} parent=71 // pred_region
          %508 = dma.done [#allocation6], 16
        $region84: #{tpu_custom_call.1} parent=71 // pred_fallthru
          _
        // Predicated region
        $region85: #{tpu_custom_call.1} parent=71 // pred_check
          %p509 = pneg %p118
        $region86: #{tpu_custom_call.1} parent=71 // pred_check_branch
          %511 = sbr.rel (%p509) target = $region88
        $region87: #{tpu_custom_call.1} parent=71 // pred_region
          %513 = dma.done [#allocation9], 3072
        $region88: #{tpu_custom_call.1} parent=71 // pred_fallthru
          _
        // Predicated region
        $region89: #{tpu_custom_call.1} parent=71 // pred_check
          %p514 = pneg %p160
        $region90: #{tpu_custom_call.1} parent=71 // pred_check_branch
          %516 = sbr.rel (%p514) target = $region92
        $region91: #{tpu_custom_call.1} parent=71 // pred_region
          %518 = dma.done [#allocation9], 1024
        $region92: #{tpu_custom_call.1} parent=71 // pred_fallthru
          _
        // Predicated region
        $region93: #{tpu_custom_call.1} parent=71 // pred_check
          %p519 = pneg %p181
        $region94: #{tpu_custom_call.1} parent=71 // pred_check_branch
          %521 = sbr.rel (%p519) target = $region96
        $region95: #{tpu_custom_call.1} parent=71 // pred_region
          %523 = dma.done [#allocation12], 16
        $region96: #{tpu_custom_call.1} parent=71 // pred_fallthru
          _
        // Predicated region
        $region97: #{tpu_custom_call.1} parent=71 // pred_check
          %p524 = pneg %p244
        $region98: #{tpu_custom_call.1} parent=71 // pred_check_branch
          %526 = sbr.rel (%p524) target = $region100
        $region99: #{tpu_custom_call.1} parent=71 // pred_region
          %528 = dma.done [#allocation12], 2048
        $region100: #{tpu_custom_call.1} parent=71 // pred_fallthru
          _
        // Predicated region
        $region101: #{tpu_custom_call.1} parent=71 // pred_check
          %p529 = pneg %p286
        $region102: #{tpu_custom_call.1} parent=71 // pred_check_branch
          %531 = sbr.rel (%p529) target = $region104
        $region103: #{tpu_custom_call.1} parent=71 // pred_region
          %533 = dma.done [#allocation15], 2048
        $region104: #{tpu_custom_call.1} parent=71 // pred_fallthru
          _
        %s534 = sand.u32 %s42, 1
        %s535 = scalar_lea.sflag [#allocation3], %s534
        %s536 = sand.u32 %s42, 1
        %s537 = smul.addr %s536, 32
        %s538 = scalar_lea.vmem [#allocation2], %s537
        %p539 = pneg %p55
        %p540 = pneg %p52
        %p541 = pneg %p76
        %p542 = pneg %p73
        %p543 = pneg %p97
        %p544 = pneg %p94
        %p545 = pneg %p118
        %p546 = pneg %p115
        %p547 = pneg %p139
        %p548 = pneg %p136
        %p549 = pneg %p160
        %p550 = pneg %p157
        %p551 = pneg %p181
        %p552 = pneg %p178
        %p553 = pneg %p202
        %p554 = pneg %p199
        %p555 = pneg %p223
        %p556 = pneg %p220
        %p557 = pneg %p244
        %p558 = pneg %p241
        %p559 = pneg %p265
        %p560 = pneg %p262
        %p561 = pneg %p286
        %p562 = pneg %p283
        %p563 = pneg %p307
        %p564 = pneg %p304
        %p565 = pneg %p333
        %p566 = pneg %p330
        %s567 = sand.u32 %s320, 1
        %s568 = scalar_lea.sflag [#allocation4], %s567
        %s569 = sand.u32 %s320, 1
        %s570 = smul.addr %s569, 32
        %s571 = scalar_lea.vmem [#allocation16], %s570
        %s572 = smul.u32 2, %s34
        %s573 = smul.u32 2, %s34
        %v575 = vld [vmem:[%s493] sm:$0xff]
        %v576 = vld [vmem:[%s493 + $0x8] sm:$0xff]
        %v577 = vld [vmem:[%s493 + $0x10] sm:$0xff]
        %v578 = vld [vmem:[%s493 + $0x18] sm:$0xff]
        %579 = vadd.xlane.f32.xlu0 %v575
        %v580 = vpop.xlane.xlu0 %579
        %581 = vadd.xlane.f32.xlu0 %v576
        %v582 = vpop.xlane.xlu0 %581
        %583 = vadd.xlane.f32.xlu0 %v577
        %v584 = vpop.xlane.xlu0 %583
        %585 = vadd.xlane.f32.xlu0 %v578
        %v586 = vpop.xlane.xlu0 %585
        %v587 = vrcp.pop 128.0
        %v588 = vmul.f32 128.0, %v587
        %v589 = vsub.f32 1.0, %v588
        %v590 = vmul.f32 %v587, %v589
        %v591 = vadd.f32 %v587, %v590
        %vm592 = vweird.f32 %v587
        %v593 = vsel %vm592, %v587, %v591
        %v594 = vmul.f32 %v580, %v593
        %v595 = vmul.f32 %v582, %v593
        %v596 = vmul.f32 %v584, %v593
        %v597 = vmul.f32 %v586, %v593
        %v598 = vsub.f32 %v575, %v594
        %v599 = vsub.f32 %v576, %v595
        %v600 = vsub.f32 %v577, %v596
        %v601 = vsub.f32 %v578, %v597
        %v602 = vmul.f32 %v598, %v598
        %v603 = vmul.f32 %v599, %v599
        %v604 = vmul.f32 %v600, %v600
        %v605 = vmul.f32 %v601, %v601
        %606 = vadd.xlane.f32.xlu0 %v602
        %v607 = vpop.xlane.xlu0 %606
        %608 = vadd.xlane.f32.xlu0 %v603
        %v609 = vpop.xlane.xlu0 %608
        %610 = vadd.xlane.f32.xlu0 %v604
        %v611 = vpop.xlane.xlu0 %610
        %612 = vadd.xlane.f32.xlu0 %v605
        %v613 = vpop.xlane.xlu0 %612
        %v614 = vmul.f32 %v607, 0.007874016
        %v615 = vmul.f32 %v609, 0.007874016
        %v616 = vmul.f32 %v611, 0.007874016
        %v617 = vmul.f32 %v613, 0.007874016
        %v618 = vrsqrt.pop %v614
        %v619 = vmul.f32 %v618, %v614
        %v620 = vmul.f32 %v619, %v618
        %v621 = vmul.f32 0.5, %v620
        %v622 = vsub.f32 1.5, %v621
        %v623 = vmul.f32 %v618, %v622
        %v624 = vmul.f32 %v614, %v623
        %vm625 = vcmp.eq.f32.partialorder %v614, inf
        %v626 = vsel %vm625, %v614, %v624
        %vm627 = vcmp.eq.f32.partialorder %v614, 0.0
        %v628 = vand.u32 %v614, 2147483648
        %v629 = vsel %vm627, %v628, %v626
        %v630 = vrsqrt.pop %v615
        %v631 = vmul.f32 %v630, %v615
        %v632 = vmul.f32 %v631, %v630
        %v633 = vmul.f32 0.5, %v632
        %v634 = vsub.f32 1.5, %v633
        %v635 = vmul.f32 %v630, %v634
        %v636 = vmul.f32 %v615, %v635
        %vm637 = vcmp.eq.f32.partialorder %v615, inf
        %v638 = vsel %vm637, %v615, %v636
        %vm639 = vcmp.eq.f32.partialorder %v615, 0.0
        %v640 = vand.u32 %v615, 2147483648
        %v641 = vsel %vm639, %v640, %v638
        %v642 = vrsqrt.pop %v616
        %v643 = vmul.f32 %v642, %v616
        %v644 = vmul.f32 %v643, %v642
        %v645 = vmul.f32 0.5, %v644
        %v646 = vsub.f32 1.5, %v645
        %v647 = vmul.f32 %v642, %v646
        %v648 = vmul.f32 %v616, %v647
        %vm649 = vcmp.eq.f32.partialorder %v616, inf
        %v650 = vsel %vm649, %v616, %v648
        %vm651 = vcmp.eq.f32.partialorder %v616, 0.0
        %v652 = vand.u32 %v616, 2147483648
        %v653 = vsel %vm651, %v652, %v650
        %v654 = vrsqrt.pop %v617
        %v655 = vmul.f32 %v654, %v617
        %v656 = vmul.f32 %v655, %v654
        %v657 = vmul.f32 0.5, %v656
        %v658 = vsub.f32 1.5, %v657
        %v659 = vmul.f32 %v654, %v658
        %v660 = vmul.f32 %v617, %v659
        %vm661 = vcmp.eq.f32.partialorder %v617, inf
        %v662 = vsel %vm661, %v617, %v660
        %vm663 = vcmp.eq.f32.partialorder %v617, 0.0
        %v664 = vand.u32 %v617, 2147483648
        %v665 = vsel %vm663, %v664, %v662
        %v666 = vld [vmem:[#allocation5] sm:$0x1]
        %v668 = vperm.slane %v666, 0
        %v670 = vmul.f32 %v668, %v598
        %v671 = vmul.f32 %v668, %v599
        %v672 = vmul.f32 %v668, %v600
        %v673 = vmul.f32 %v668, %v601
        %v674 = vadd.f32 %v629, 1e-06
        %v675 = vadd.f32 %v641, 1e-06
        %v676 = vadd.f32 %v653, 1e-06
        %v677 = vadd.f32 %v665, 1e-06
        %v678 = vrcp.pop %v674
        %v679 = vmul.f32 %v674, %v678
        %v680 = vsub.f32 1.0, %v679
        %v681 = vmul.f32 %v678, %v680
        %v682 = vadd.f32 %v678, %v681
        %vm683 = vweird.f32 %v674
        %vm684 = vweird.f32 %v678
        %vm685 = vmor %vm683, %vm684
        %v686 = vsel %vm685, %v678, %v682
        %v687 = vand.u32 2147483647, %v674
        %vm688 = vcmp.eq.f32.partialorder %v687, 8.507059e+37
        %v689 = vand.u32 %v674, 2147483648
        %v690 = vor.u32 1.1754944e-38, %v689
        %v691 = vsel %vm688, %v690, %v686
        %v692 = vmul.f32 %v670, %v691
        %v693 = vrcp.pop %v675
        %v694 = vmul.f32 %v675, %v693
        %v695 = vsub.f32 1.0, %v694
        %v696 = vmul.f32 %v693, %v695
        %v697 = vadd.f32 %v693, %v696
        %vm698 = vweird.f32 %v675
        %vm699 = vweird.f32 %v693
        %vm700 = vmor %vm698, %vm699
        %v701 = vsel %vm700, %v693, %v697
        %v702 = vand.u32 2147483647, %v675
        %vm703 = vcmp.eq.f32.partialorder %v702, 8.507059e+37
        %v704 = vand.u32 %v675, 2147483648
        %v705 = vor.u32 1.1754944e-38, %v704
        %v706 = vsel %vm703, %v705, %v701
        %v707 = vmul.f32 %v671, %v706
        %v708 = vrcp.pop %v676
        %v709 = vmul.f32 %v676, %v708
        %v710 = vsub.f32 1.0, %v709
        %v711 = vmul.f32 %v708, %v710
        %v712 = vadd.f32 %v708, %v711
        %vm713 = vweird.f32 %v676
        %vm714 = vweird.f32 %v708
        %vm715 = vmor %vm713, %vm714
        %v716 = vsel %vm715, %v708, %v712
        %v717 = vand.u32 2147483647, %v676
        %vm718 = vcmp.eq.f32.partialorder %v717, 8.507059e+37
        %v719 = vand.u32 %v676, 2147483648
        %v720 = vor.u32 1.1754944e-38, %v719
        %v721 = vsel %vm718, %v720, %v716
        %v722 = vmul.f32 %v672, %v721
        %v723 = vrcp.pop %v677
        %v724 = vmul.f32 %v677, %v723
        %v725 = vsub.f32 1.0, %v724
        %v726 = vmul.f32 %v723, %v725
        %v727 = vadd.f32 %v723, %v726
        %vm728 = vweird.f32 %v677
        %vm729 = vweird.f32 %v723
        %vm730 = vmor %vm728, %vm729
        %v731 = vsel %vm730, %v723, %v727
        %v732 = vand.u32 2147483647, %v677
        %vm733 = vcmp.eq.f32.partialorder %v732, 8.507059e+37
        %v734 = vand.u32 %v677, 2147483648
        %v735 = vor.u32 1.1754944e-38, %v734
        %v736 = vsel %vm733, %v735, %v731
        %v737 = vmul.f32 %v673, %v736
        %v738 = vld [vmem:[#allocation7] sm:$0x1]
        %v740 = vperm.slane %v738, 0
        %v742 = vadd.f32 %v692, %v740
        %v743 = vadd.f32 %v707, %v740
        %v744 = vadd.f32 %v722, %v740
        %v745 = vadd.f32 %v737, %v740
        %v746 = vpack.c.bf16 %v743, %v742
        %v747 = vpack.c.bf16 %v745, %v744
        %v748 = vld [vmem:[#allocation8] sm:$0xf]
        %v749 = vld [vmem:[#allocation8 + $0x4] sm:$0xf]
        %v750 = vld [vmem:[#allocation8 + $0x8] sm:$0xf]
        %v751 = vld [vmem:[#allocation8 + $0xc] sm:$0xf]
        %v752 = vld [vmem:[#allocation8 + $0x10] sm:$0xf]
        %v753 = vld [vmem:[#allocation8 + $0x14] sm:$0xf]
        %v754 = vld [vmem:[#allocation8 + $0x18] sm:$0xf]
        %v755 = vld [vmem:[#allocation8 + $0x1c] sm:$0xf]
        %v756 = vld [vmem:[#allocation8 + $0x20] sm:$0xf]
        %v757 = vld [vmem:[#allocation8 + $0x24] sm:$0xf]
        %v758 = vld [vmem:[#allocation8 + $0x28] sm:$0xf]
        %v759 = vld [vmem:[#allocation8 + $0x2c] sm:$0xf]
        %v760 = vld [vmem:[#allocation8 + $0x30] sm:$0xf]
        %v761 = vld [vmem:[#allocation8 + $0x34] sm:$0xf]
        %v762 = vld [vmem:[#allocation8 + $0x38] sm:$0xf]
        %v763 = vld [vmem:[#allocation8 + $0x3c] sm:$0xf]
        %v764 = vld [vmem:[#allocation8 + $0x40] sm:$0xf]
        %v765 = vld [vmem:[#allocation8 + $0x44] sm:$0xf]
        %v766 = vld [vmem:[#allocation8 + $0x48] sm:$0xf]
        %v767 = vld [vmem:[#allocation8 + $0x4c] sm:$0xf]
        %v768 = vld [vmem:[#allocation8 + $0x50] sm:$0xf]
        %v769 = vld [vmem:[#allocation8 + $0x54] sm:$0xf]
        %v770 = vld [vmem:[#allocation8 + $0x58] sm:$0xf]
        %v771 = vld [vmem:[#allocation8 + $0x5c] sm:$0xf]
        %v772 = vld [vmem:[#allocation8 + $0x60] sm:$0xf]
        %v773 = vld [vmem:[#allocation8 + $0x64] sm:$0xf]
        %v774 = vld [vmem:[#allocation8 + $0x68] sm:$0xf]
        %v775 = vld [vmem:[#allocation8 + $0x6c] sm:$0xf]
        %v776 = vld [vmem:[#allocation8 + $0x70] sm:$0xf]
        %v777 = vld [vmem:[#allocation8 + $0x74] sm:$0xf]
        %v778 = vld [vmem:[#allocation8 + $0x78] sm:$0xf]
        %v779 = vld [vmem:[#allocation8 + $0x7c] sm:$0xf]
        %v780 = vld [vmem:[#allocation8 + $0x80] sm:$0xf]
        %v781 = vld [vmem:[#allocation8 + $0x84] sm:$0xf]
        %v782 = vld [vmem:[#allocation8 + $0x88] sm:$0xf]
        %v783 = vld [vmem:[#allocation8 + $0x8c] sm:$0xf]
        %v784 = vld [vmem:[#allocation8 + $0x90] sm:$0xf]
        %v785 = vld [vmem:[#allocation8 + $0x94] sm:$0xf]
        %v786 = vld [vmem:[#allocation8 + $0x98] sm:$0xf]
        %v787 = vld [vmem:[#allocation8 + $0x9c] sm:$0xf]
        %v788 = vld [vmem:[#allocation8 + $0xa0] sm:$0xf]
        %v789 = vld [vmem:[#allocation8 + $0xa4] sm:$0xf]
        %v790 = vld [vmem:[#allocation8 + $0xa8] sm:$0xf]
        %v791 = vld [vmem:[#allocation8 + $0xac] sm:$0xf]
        %v792 = vld [vmem:[#allocation8 + $0xb0] sm:$0xf]
        %v793 = vld [vmem:[#allocation8 + $0xb4] sm:$0xf]
        %v794 = vld [vmem:[#allocation8 + $0xb8] sm:$0xf]
        %v795 = vld [vmem:[#allocation8 + $0xbc] sm:$0xf]
        %v796 = vld [vmem:[%s4] sm:$0x7]
        %v798 = vperm.slane %v796, 0
        %v799 = vperm.slane %v796, 1
        %v800 = vperm.slane %v796, 2
        %v852 = vunpack.c.l.b16 %v748
        %v853 = vunpack.c.l.b16 %v749
        %v854 = vunpack.c.l.b16 %v750
        %v855 = vunpack.c.l.b16 %v751
        %v856 = vunpack.c.l.b16 %v752
        %v857 = vunpack.c.l.b16 %v753
        %v858 = vunpack.c.l.b16 %v754
        %v859 = vunpack.c.l.b16 %v755
        %v860 = vunpack.c.l.b16 %v756
        %v861 = vunpack.c.l.b16 %v757
        %v862 = vunpack.c.l.b16 %v758
        %v863 = vunpack.c.l.b16 %v759
        %v864 = vunpack.c.l.b16 %v760
        %v865 = vunpack.c.l.b16 %v761
        %v866 = vunpack.c.l.b16 %v762
        %v867 = vunpack.c.l.b16 %v763
        %v868 = vunpack.c.l.b16 %v764
        %v869 = vunpack.c.l.b16 %v765
        %v870 = vunpack.c.l.b16 %v766
        %v871 = vunpack.c.l.b16 %v767
        %v872 = vunpack.c.l.b16 %v768
        %v873 = vunpack.c.l.b16 %v769
        %v874 = vunpack.c.l.b16 %v770
        %v875 = vunpack.c.l.b16 %v771
        %v876 = vunpack.c.l.b16 %v772
        %v877 = vunpack.c.l.b16 %v773
        %v878 = vunpack.c.l.b16 %v774
        %v879 = vunpack.c.l.b16 %v775
        %v880 = vunpack.c.l.b16 %v776
        %v881 = vunpack.c.l.b16 %v777
        %v882 = vunpack.c.l.b16 %v778
        %v883 = vunpack.c.l.b16 %v779
        %v884 = vunpack.c.l.b16 %v780
        %v885 = vunpack.c.l.b16 %v781
        %v886 = vunpack.c.l.b16 %v782
        %v887 = vunpack.c.l.b16 %v783
        %v888 = vunpack.c.l.b16 %v784
        %v889 = vunpack.c.l.b16 %v785
        %v890 = vunpack.c.l.b16 %v786
        %v891 = vunpack.c.l.b16 %v787
        %v892 = vunpack.c.l.b16 %v788
        %v893 = vunpack.c.l.b16 %v789
        %v894 = vunpack.c.l.b16 %v790
        %v895 = vunpack.c.l.b16 %v791
        %v896 = vunpack.c.l.b16 %v792
        %v897 = vunpack.c.l.b16 %v793
        %v898 = vunpack.c.l.b16 %v794
        %v899 = vunpack.c.l.b16 %v795
        %v900 = vpack.c.b16 %v853, %v852
        %v901 = vpack.c.b16 %v855, %v854
        %v902 = vpack.c.b16 %v857, %v856
        %v903 = vpack.c.b16 %v859, %v858
        %v904 = vpack.c.b16 %v861, %v860
        %v905 = vpack.c.b16 %v863, %v862
        %v906 = vpack.c.b16 %v865, %v864
        %v907 = vpack.c.b16 %v867, %v866
        %v908 = vpack.c.b16 %v869, %v868
        %v909 = vpack.c.b16 %v871, %v870
        %v910 = vpack.c.b16 %v873, %v872
        %v911 = vpack.c.b16 %v875, %v874
        %v912 = vpack.c.b16 %v877, %v876
        %v913 = vpack.c.b16 %v879, %v878
        %v914 = vpack.c.b16 %v881, %v880
        %v915 = vpack.c.b16 %v883, %v882
        %v916 = vpack.c.b16 %v885, %v884
        %v917 = vpack.c.b16 %v887, %v886
        %v918 = vpack.c.b16 %v889, %v888
        %v919 = vpack.c.b16 %v891, %v890
        %v920 = vpack.c.b16 %v893, %v892
        %v921 = vpack.c.b16 %v895, %v894
        %v922 = vpack.c.b16 %v897, %v896
        %v923 = vpack.c.b16 %v899, %v898
        %948 = vmatpush.bf16.xpose.msra.mxu0 %v907
        %949 = vmatpush.bf16.xpose.msra.mxu0 %v906
        %950 = vmatpush.bf16.xpose.msra.mxu0 %v905
        %951 = vmatpush.bf16.xpose.msra.mxu0 %v904
        %952 = vmatpush.bf16.xpose.msra.mxu0 %v903
        %953 = vmatpush.bf16.xpose.msra.mxu0 %v902
        %954 = vmatpush.bf16.xpose.msra.mxu0 %v901
        %955 = vmatpush.bf16.xpose.msra.mxu0 %v900
        %956 = vmatmul.bf16.gmra.mxu0 %v746
        %v957 = vpop.f32.mrf.mxu0
        %v958 = vadd.f32 %v798, %v957
        %v959 = vpop.f32.mrf.mxu0
        %v960 = vadd.f32 %v798, %v959
        %961 = vmatmul.bf16.gmra.mxu0 %v747
        %v962 = vpop.f32.mrf.mxu0
        %v963 = vadd.f32 %v798, %v962
        %v964 = vpop.f32.mrf.mxu0
        %v965 = vadd.f32 %v798, %v964
        %966 = vdwg.mxu0
        %967 = vmatpush.bf16.xpose.msra.mxu0 %v915
        %968 = vmatpush.bf16.xpose.msra.mxu0 %v914
        %969 = vmatpush.bf16.xpose.msra.mxu0 %v913
        %970 = vmatpush.bf16.xpose.msra.mxu0 %v912
        %971 = vmatpush.bf16.xpose.msra.mxu0 %v911
        %972 = vmatpush.bf16.xpose.msra.mxu0 %v910
        %973 = vmatpush.bf16.xpose.msra.mxu0 %v909
        %974 = vmatpush.bf16.xpose.msra.mxu0 %v908
        %975 = vmatmul.bf16.gmra.mxu0 %v746
        %v976 = vpop.f32.mrf.mxu0
        %v977 = vadd.f32 %v799, %v976
        %v978 = vpop.f32.mrf.mxu0
        %v979 = vadd.f32 %v799, %v978
        %980 = vmatmul.bf16.gmra.mxu0 %v747
        %v981 = vpop.f32.mrf.mxu0
        %v982 = vadd.f32 %v799, %v981
        %v983 = vpop.f32.mrf.mxu0
        %v984 = vadd.f32 %v799, %v983
        %985 = vdwg.mxu0
        %986 = vmatpush.bf16.xpose.msra.mxu0 %v923
        %987 = vmatpush.bf16.xpose.msra.mxu0 %v922
        %988 = vmatpush.bf16.xpose.msra.mxu0 %v921
        %989 = vmatpush.bf16.xpose.msra.mxu0 %v920
        %990 = vmatpush.bf16.xpose.msra.mxu0 %v919
        %991 = vmatpush.bf16.xpose.msra.mxu0 %v918
        %992 = vmatpush.bf16.xpose.msra.mxu0 %v917
        %993 = vmatpush.bf16.xpose.msra.mxu0 %v916
        %994 = vmatmul.bf16.gmra.mxu0 %v746
        %v995 = vpop.f32.mrf.mxu0
        %v996 = vadd.f32 %v800, %v995
        %v997 = vpop.f32.mrf.mxu0
        %v998 = vadd.f32 %v800, %v997
        %999 = vmatmul.bf16.gmra.mxu0 %v747
        %v1000 = vpop.f32.mrf.mxu0
        %v1001 = vadd.f32 %v800, %v1000
        %v1002 = vpop.f32.mrf.mxu0
        %v1003 = vadd.f32 %v800, %v1002
        %1004 = vdwg.mxu0
        %v1005 = vmul.f32 %v958, 0.17677669
        %v1006 = vmul.f32 %v960, 0.17677669
        %v1007 = vmul.f32 %v963, 0.17677669
        %v1008 = vmul.f32 %v965, 0.17677669
        %v1009 = vpack.c.bf16 %v1005, %v1005
        %v1010 = vpack.c.bf16 %v1006, %v1006
        %v1011 = vpack.c.bf16 %v1007, %v1007
        %v1012 = vpack.c.bf16 %v1008, %v1008
        %v1013 = vpack.c.bf16 %v977, %v977
        %v1014 = vpack.c.bf16 %v979, %v979
        %v1015 = vpack.c.bf16 %v982, %v982
        %v1016 = vpack.c.bf16 %v984, %v984
        %v1017 = vpack.c.bf16 %v996, %v996
        %v1018 = vpack.c.bf16 %v998, %v998
        %v1019 = vpack.c.bf16 %v1001, %v1001
        %v1020 = vpack.c.bf16 %v1003, %v1003
        %v1023 = vunpack.c.l.b16 %v1009
        %v1024 = vunpack.c.l.b16 %v1010
        %v1025 = vpack.c.b16 %v1024, %v1023
        %v1028 = vunpack.c.l.b16 %v1013
        %v1029 = vunpack.c.l.b16 %v1014
        %v1030 = vpack.c.b16 %v1029, %v1028
        %vm1031 = vcmask 261120
        %v1033 = vsel %vm1031, %v1025, 0
        %v1036 = vsel %vm1031, %v1030, 0
        %1038 = vmatpush.bf16.xpose.msra.mxu0 0
        %1039 = vmatpush.bf16.xpose.msra.mxu0 0
        %1040 = vmatpush.bf16.xpose.msra.mxu0 0
        %1041 = vmatpush.bf16.xpose.msra.mxu0 0
        %1042 = vmatpush.bf16.xpose.msra.mxu0 0
        %1043 = vmatpush.bf16.xpose.msra.mxu0 0
        %1044 = vmatpush.bf16.xpose.msra.mxu0 0
        %1045 = vmatpush.bf16.xpose.msra.mxu0 %v1036
        %1046 = vmatmul.bf16.gmra.mxu0 %v1033
        %v1047 = vpop.f32.mrf.mxu0
        %v1048 = vadd.f32 0.0, %v1047
        %v1049 = vpop.f32.mrf.mxu0
        %v1050 = vadd.f32 0.0, %v1049
        %1051 = vdwg.mxu0
        %v1054 = vunpack.c.l.b16 %v1011
        %v1055 = vunpack.c.l.b16 %v1012
        %v1056 = vpack.c.b16 %v1055, %v1054
        %v1059 = vunpack.c.l.b16 %v1015
        %v1060 = vunpack.c.l.b16 %v1016
        %v1061 = vpack.c.b16 %v1060, %v1059
        %v1063 = vsel %vm1031, %v1056, 0
        %v1066 = vsel %vm1031, %v1061, 0
        %1068 = vmatpush.bf16.xpose.msra.mxu0 0
        %1069 = vmatpush.bf16.xpose.msra.mxu0 0
        %1070 = vmatpush.bf16.xpose.msra.mxu0 0
        %1071 = vmatpush.bf16.xpose.msra.mxu0 0
        %1072 = vmatpush.bf16.xpose.msra.mxu0 0
        %1073 = vmatpush.bf16.xpose.msra.mxu0 0
        %1074 = vmatpush.bf16.xpose.msra.mxu0 0
        %1075 = vmatpush.bf16.xpose.msra.mxu0 %v1066
        %1076 = vmatmul.bf16.gmra.mxu0 %v1063
        %v1077 = vpop.f32.mrf.mxu0
        %v1078 = vadd.f32 0.0, %v1077
        %v1079 = vpop.f32.mrf.mxu0
        %v1080 = vadd.f32 0.0, %v1079
        %1081 = vdwg.mxu0
        %vm1082 = vcmask 130048
        %v1083 = vsel %vm1082, %v1048, -inf
        %1084 = vmax.xlane.f32.xlu0 %v1083
        %v1085 = vpop.xlane.xlu0 %1084
        %v1086 = vsel %vm1082, %v1050, -inf
        %1087 = vmax.xlane.f32.xlu0 %v1086
        %v1088 = vpop.xlane.xlu0 %1087
        %v1089 = vsel %vm1082, %v1078, -inf
        %1090 = vmax.xlane.f32.xlu0 %v1089
        %v1091 = vpop.xlane.xlu0 %1090
        %v1092 = vsel %vm1082, %v1080, -inf
        %1093 = vmax.xlane.f32.xlu0 %v1092
        %v1094 = vpop.xlane.xlu0 %1093
        %v1095 = vsub.f32 %v1048, %v1085
        %v1096 = vsub.f32 %v1050, %v1088
        %v1097 = vsub.f32 %v1078, %v1091
        %v1098 = vsub.f32 %v1080, %v1094
        %v1099 = vmul.f32 %v1095, 1.442695
        %v1100 = vpow.pop %v1099
        %v1101 = vmul.f32 %v1096, 1.442695
        %v1102 = vpow.pop %v1101
        %v1103 = vmul.f32 %v1097, 1.442695
        %v1104 = vpow.pop %v1103
        %v1105 = vmul.f32 %v1098, 1.442695
        %v1106 = vpow.pop %v1105
        %v1107 = vsel %vm1082, %v1100, 0.0
        %1108 = vadd.xlane.f32.xlu0 %v1107
        %v1109 = vpop.xlane.xlu0 %1108
        %v1110 = vsel %vm1082, %v1102, 0.0
        %1111 = vadd.xlane.f32.xlu0 %v1110
        %v1112 = vpop.xlane.xlu0 %1111
        %v1113 = vsel %vm1082, %v1104, 0.0
        %1114 = vadd.xlane.f32.xlu0 %v1113
        %v1115 = vpop.xlane.xlu0 %1114
        %v1116 = vsel %vm1082, %v1106, 0.0
        %1117 = vadd.xlane.f32.xlu0 %v1116
        %v1118 = vpop.xlane.xlu0 %1117
        %v1119 = vrcp.pop %v1109
        %v1120 = vrcp.pop %v1112
        %v1121 = vrcp.pop %v1115
        %v1122 = vrcp.pop %v1118
        %v1123 = vmul.f32 %v1109, %v1119
        %v1124 = vmul.f32 %v1112, %v1120
        %v1125 = vmul.f32 %v1115, %v1121
        %v1126 = vmul.f32 %v1118, %v1122
        %v1127 = vsub.f32 2.0, %v1123
        %v1128 = vsub.f32 2.0, %v1124
        %v1129 = vsub.f32 2.0, %v1125
        %v1130 = vsub.f32 2.0, %v1126
        %v1131 = vmul.f32 %v1119, %v1127
        %v1132 = vmul.f32 %v1120, %v1128
        %v1133 = vmul.f32 %v1121, %v1129
        %v1134 = vmul.f32 %v1122, %v1130
        %v1135 = vmul.f32 %v1100, %v1131
        %v1136 = vmul.f32 %v1102, %v1132
        %v1137 = vmul.f32 %v1104, %v1133
        %v1138 = vmul.f32 %v1106, %v1134
        %v1139 = vpack.c.bf16 %v1135, %v1135
        %v1140 = vpack.c.bf16 %v1136, %v1136
        %v1141 = vpack.c.bf16 %v1137, %v1137
        %v1142 = vpack.c.bf16 %v1138, %v1138
        %v1145 = vunpack.c.l.b16 %v1139
        %v1146 = vunpack.c.l.b16 %v1140
        %v1147 = vpack.c.b16 %v1146, %v1145
        %v1150 = vunpack.c.l.b16 %v1017
        %v1151 = vunpack.c.l.b16 %v1018
        %v1152 = vpack.c.b16 %v1151, %v1150
        %v1155 = vsel %vm1082, %v1147, 0
        %1157 = vmatpush.bf16.msra.mxu0 0
        %1158 = vmatpush.bf16.msra.mxu0 0
        %1159 = vmatpush.bf16.msra.mxu0 0
        %1160 = vmatpush.bf16.msra.mxu0 0
        %1161 = vmatpush.bf16.msra.mxu0 0
        %1162 = vmatpush.bf16.msra.mxu0 0
        %1163 = vmatpush.bf16.msra.mxu0 0
        %1164 = vmatpush.bf16.msra.mxu0 %v1152
        %1165 = vmatmul.bf16.gmra.mxu0 %v1155
        %v1166 = vpop.f32.mrf.mxu0
        %v1167 = vadd.f32 0.0, %v1166
        %v1168 = vpop.f32.mrf.mxu0
        %v1169 = vadd.f32 0.0, %v1168
        %1170 = vdwg.mxu0
        %v1173 = vunpack.c.l.b16 %v1141
        %v1174 = vunpack.c.l.b16 %v1142
        %v1175 = vpack.c.b16 %v1174, %v1173
        %v1178 = vunpack.c.l.b16 %v1019
        %v1179 = vunpack.c.l.b16 %v1020
        %v1180 = vpack.c.b16 %v1179, %v1178
        %v1183 = vsel %vm1082, %v1175, 0
        %1185 = vmatpush.bf16.msra.mxu0 0
        %1186 = vmatpush.bf16.msra.mxu0 0
        %1187 = vmatpush.bf16.msra.mxu0 0
        %1188 = vmatpush.bf16.msra.mxu0 0
        %1189 = vmatpush.bf16.msra.mxu0 0
        %1190 = vmatpush.bf16.msra.mxu0 0
        %1191 = vmatpush.bf16.msra.mxu0 0
        %1192 = vmatpush.bf16.msra.mxu0 %v1180
        %1193 = vmatmul.bf16.gmra.mxu0 %v1183
        %v1194 = vpop.f32.mrf.mxu0
        %v1195 = vadd.f32 0.0, %v1194
        %v1196 = vpop.f32.mrf.mxu0
        %v1197 = vadd.f32 0.0, %v1196
        %1198 = vdwg.mxu0
        %v1199 = vpack.c.bf16 %v1169, %v1167
        %v1200 = vpack.c.bf16 %v1197, %v1195
        %v1201 = vld [vmem:[#allocation10] sm:$0xf]
        %v1202 = vld [vmem:[#allocation10 + $0x4] sm:$0xf]
        %v1203 = vld [vmem:[#allocation10 + $0x8] sm:$0xf]
        %v1204 = vld [vmem:[#allocation10 + $0xc] sm:$0xf]
        %v1205 = vld [vmem:[#allocation10 + $0x10] sm:$0xf]
        %v1206 = vld [vmem:[#allocation10 + $0x14] sm:$0xf]
        %v1207 = vld [vmem:[#allocation10 + $0x18] sm:$0xf]
        %v1208 = vld [vmem:[#allocation10 + $0x1c] sm:$0xf]
        %v1209 = vld [vmem:[#allocation10 + $0x20] sm:$0xf]
        %v1210 = vld [vmem:[#allocation10 + $0x24] sm:$0xf]
        %v1211 = vld [vmem:[#allocation10 + $0x28] sm:$0xf]
        %v1212 = vld [vmem:[#allocation10 + $0x2c] sm:$0xf]
        %v1213 = vld [vmem:[#allocation10 + $0x30] sm:$0xf]
        %v1214 = vld [vmem:[#allocation10 + $0x34] sm:$0xf]
        %v1215 = vld [vmem:[#allocation10 + $0x38] sm:$0xf]
        %v1216 = vld [vmem:[#allocation10 + $0x3c] sm:$0xf]
        %1217 = vrot.lane.b32.xlu0 %v1025, 96
        %v1218 = vpop.permute.xlu0 %1217
        %1219 = vrot.lane.b32.xlu0 %v1030, 96
        %v1220 = vpop.permute.xlu0 %1219
        %v1222 = vsel %vm1031, %v1218, 0
        %v1225 = vsel %vm1031, %v1220, 0
        %1227 = vmatpush.bf16.xpose.msra.mxu0 0
        %1228 = vmatpush.bf16.xpose.msra.mxu0 0
        %1229 = vmatpush.bf16.xpose.msra.mxu0 0
        %1230 = vmatpush.bf16.xpose.msra.mxu0 0
        %1231 = vmatpush.bf16.xpose.msra.mxu0 0
        %1232 = vmatpush.bf16.xpose.msra.mxu0 0
        %1233 = vmatpush.bf16.xpose.msra.mxu0 0
        %1234 = vmatpush.bf16.xpose.msra.mxu0 %v1225
        %1235 = vmatmul.bf16.gmra.mxu0 %v1222
        %v1236 = vpop.f32.mrf.mxu0
        %v1237 = vadd.f32 0.0, %v1236
        %v1238 = vpop.f32.mrf.mxu0
        %v1239 = vadd.f32 0.0, %v1238
        %1240 = vdwg.mxu0
        %1241 = vrot.lane.b32.xlu0 %v1056, 96
        %v1242 = vpop.permute.xlu0 %1241
        %1243 = vrot.lane.b32.xlu0 %v1061, 96
        %v1244 = vpop.permute.xlu0 %1243
        %v1246 = vsel %vm1031, %v1242, 0
        %v1249 = vsel %vm1031, %v1244, 0
        %1251 = vmatpush.bf16.xpose.msra.mxu0 0
        %1252 = vmatpush.bf16.xpose.msra.mxu0 0
        %1253 = vmatpush.bf16.xpose.msra.mxu0 0
        %1254 = vmatpush.bf16.xpose.msra.mxu0 0
        %1255 = vmatpush.bf16.xpose.msra.mxu0 0
        %1256 = vmatpush.bf16.xpose.msra.mxu0 0
        %1257 = vmatpush.bf16.xpose.msra.mxu0 0
        %1258 = vmatpush.bf16.xpose.msra.mxu0 %v1249
        %1259 = vmatmul.bf16.gmra.mxu0 %v1246
        %v1260 = vpop.f32.mrf.mxu0
        %v1261 = vadd.f32 0.0, %v1260
        %v1262 = vpop.f32.mrf.mxu0
        %v1263 = vadd.f32 0.0, %v1262
        %1264 = vdwg.mxu0
        %v1265 = vsel %vm1082, %v1237, -inf
        %1266 = vmax.xlane.f32.xlu0 %v1265
        %v1267 = vpop.xlane.xlu0 %1266
        %v1268 = vsel %vm1082, %v1239, -inf
        %1269 = vmax.xlane.f32.xlu0 %v1268
        %v1270 = vpop.xlane.xlu0 %1269
        %v1271 = vsel %vm1082, %v1261, -inf
        %1272 = vmax.xlane.f32.xlu0 %v1271
        %v1273 = vpop.xlane.xlu0 %1272
        %v1274 = vsel %vm1082, %v1263, -inf
        %1275 = vmax.xlane.f32.xlu0 %v1274
        %v1276 = vpop.xlane.xlu0 %1275
        %v1277 = vsub.f32 %v1237, %v1267
        %v1278 = vsub.f32 %v1239, %v1270
        %v1279 = vsub.f32 %v1261, %v1273
        %v1280 = vsub.f32 %v1263, %v1276
        %v1281 = vmul.f32 %v1277, 1.442695
        %v1282 = vpow.pop %v1281
        %v1283 = vmul.f32 %v1278, 1.442695
        %v1284 = vpow.pop %v1283
        %v1285 = vmul.f32 %v1279, 1.442695
        %v1286 = vpow.pop %v1285
        %v1287 = vmul.f32 %v1280, 1.442695
        %v1288 = vpow.pop %v1287
        %v1289 = vsel %vm1082, %v1282, 0.0
        %1290 = vadd.xlane.f32.xlu0 %v1289
        %v1291 = vpop.xlane.xlu0 %1290
        %v1292 = vsel %vm1082, %v1284, 0.0
        %1293 = vadd.xlane.f32.xlu0 %v1292
        %v1294 = vpop.xlane.xlu0 %1293
        %v1295 = vsel %vm1082, %v1286, 0.0
        %1296 = vadd.xlane.f32.xlu0 %v1295
        %v1297 = vpop.xlane.xlu0 %1296
        %v1298 = vsel %vm1082, %v1288, 0.0
        %1299 = vadd.xlane.f32.xlu0 %v1298
        %v1300 = vpop.xlane.xlu0 %1299
        %v1301 = vrcp.pop %v1291
        %v1302 = vrcp.pop %v1294
        %v1303 = vrcp.pop %v1297
        %v1304 = vrcp.pop %v1300
        %v1305 = vmul.f32 %v1291, %v1301
        %v1306 = vmul.f32 %v1294, %v1302
        %v1307 = vmul.f32 %v1297, %v1303
        %v1308 = vmul.f32 %v1300, %v1304
        %v1309 = vsub.f32 2.0, %v1305
        %v1310 = vsub.f32 2.0, %v1306
        %v1311 = vsub.f32 2.0, %v1307
        %v1312 = vsub.f32 2.0, %v1308
        %v1313 = vmul.f32 %v1301, %v1309
        %v1314 = vmul.f32 %v1302, %v1310
        %v1315 = vmul.f32 %v1303, %v1311
        %v1316 = vmul.f32 %v1304, %v1312
        %v1317 = vmul.f32 %v1282, %v1313
        %v1318 = vmul.f32 %v1284, %v1314
        %v1319 = vmul.f32 %v1286, %v1315
        %v1320 = vmul.f32 %v1288, %v1316
        %v1321 = vpack.c.bf16 %v1317, %v1317
        %v1322 = vpack.c.bf16 %v1318, %v1318
        %v1323 = vpack.c.bf16 %v1319, %v1319
        %v1324 = vpack.c.bf16 %v1320, %v1320
        %v1327 = vunpack.c.l.b16 %v1321
        %v1328 = vunpack.c.l.b16 %v1322
        %v1329 = vpack.c.b16 %v1328, %v1327
        %1330 = vrot.lane.b32.xlu0 %v1152, 96
        %v1331 = vpop.permute.xlu0 %1330
        %v1334 = vsel %vm1082, %v1329, 0
        %1336 = vmatpush.bf16.msra.mxu0 0
        %1337 = vmatpush.bf16.msra.mxu0 0
        %1338 = vmatpush.bf16.msra.mxu0 0
        %1339 = vmatpush.bf16.msra.mxu0 0
        %1340 = vmatpush.bf16.msra.mxu0 0
        %1341 = vmatpush.bf16.msra.mxu0 0
        %1342 = vmatpush.bf16.msra.mxu0 0
        %1343 = vmatpush.bf16.msra.mxu0 %v1331
        %1344 = vmatmul.bf16.gmra.mxu0 %v1334
        %v1345 = vpop.f32.mrf.mxu0
        %v1346 = vadd.f32 0.0, %v1345
        %v1347 = vpop.f32.mrf.mxu0
        %v1348 = vadd.f32 0.0, %v1347
        %1349 = vdwg.mxu0
        %v1352 = vunpack.c.l.b16 %v1323
        %v1353 = vunpack.c.l.b16 %v1324
        %v1354 = vpack.c.b16 %v1353, %v1352
        %1355 = vrot.lane.b32.xlu0 %v1180, 96
        %v1356 = vpop.permute.xlu0 %1355
        %v1359 = vsel %vm1082, %v1354, 0
        %1361 = vmatpush.bf16.msra.mxu0 0
        %1362 = vmatpush.bf16.msra.mxu0 0
        %1363 = vmatpush.bf16.msra.mxu0 0
        %1364 = vmatpush.bf16.msra.mxu0 0
        %1365 = vmatpush.bf16.msra.mxu0 0
        %1366 = vmatpush.bf16.msra.mxu0 0
        %1367 = vmatpush.bf16.msra.mxu0 0
        %1368 = vmatpush.bf16.msra.mxu0 %v1356
        %1369 = vmatmul.bf16.gmra.mxu0 %v1359
        %v1370 = vpop.f32.mrf.mxu0
        %v1371 = vadd.f32 0.0, %v1370
        %v1372 = vpop.f32.mrf.mxu0
        %v1373 = vadd.f32 0.0, %v1372
        %1374 = vdwg.mxu0
        %v1375 = vpack.c.bf16 %v1348, %v1346
        %v1376 = vpack.c.bf16 %v1373, %v1371
        %v1377 = vld [vmem:[#allocation10] sm:$0xf]
        %v1378 = vld [vmem:[#allocation10 + $0x4] sm:$0xf]
        %v1379 = vld [vmem:[#allocation10 + $0x8] sm:$0xf]
        %v1380 = vld [vmem:[#allocation10 + $0xc] sm:$0xf]
        %v1381 = vld [vmem:[#allocation10 + $0x10] sm:$0xf]
        %v1382 = vld [vmem:[#allocation10 + $0x14] sm:$0xf]
        %v1383 = vld [vmem:[#allocation10 + $0x18] sm:$0xf]
        %v1384 = vld [vmem:[#allocation10 + $0x1c] sm:$0xf]
        %v1385 = vld [vmem:[#allocation10 + $0x20] sm:$0xf]
        %v1386 = vld [vmem:[#allocation10 + $0x24] sm:$0xf]
        %v1387 = vld [vmem:[#allocation10 + $0x28] sm:$0xf]
        %v1388 = vld [vmem:[#allocation10 + $0x2c] sm:$0xf]
        %v1389 = vld [vmem:[#allocation10 + $0x30] sm:$0xf]
        %v1390 = vld [vmem:[#allocation10 + $0x34] sm:$0xf]
        %v1391 = vld [vmem:[#allocation10 + $0x38] sm:$0xf]
        %v1392 = vld [vmem:[#allocation10 + $0x3c] sm:$0xf]
        %v1409 = vunpack.c.l.b16 %v1377
        %v1410 = vunpack.c.l.b16 %v1378
        %v1411 = vunpack.c.l.b16 %v1379
        %v1412 = vunpack.c.l.b16 %v1380
        %v1413 = vunpack.c.l.b16 %v1381
        %v1414 = vunpack.c.l.b16 %v1382
        %v1415 = vunpack.c.l.b16 %v1383
        %v1416 = vunpack.c.l.b16 %v1384
        %v1417 = vunpack.c.l.b16 %v1385
        %v1418 = vunpack.c.l.b16 %v1386
        %v1419 = vunpack.c.l.b16 %v1387
        %v1420 = vunpack.c.l.b16 %v1388
        %v1421 = vunpack.c.l.b16 %v1389
        %v1422 = vunpack.c.l.b16 %v1390
        %v1423 = vunpack.c.l.b16 %v1391
        %v1424 = vunpack.c.l.b16 %v1392
        %v1425 = vpack.c.b16 %v1410, %v1409
        %v1426 = vpack.c.b16 %v1412, %v1411
        %v1427 = vpack.c.b16 %v1414, %v1413
        %v1428 = vpack.c.b16 %v1416, %v1415
        %v1429 = vpack.c.b16 %v1418, %v1417
        %v1430 = vpack.c.b16 %v1420, %v1419
        %v1431 = vpack.c.b16 %v1422, %v1421
        %v1432 = vpack.c.b16 %v1424, %v1423
        %1433 = vrot.lane.b32.xlu0 %v1425, 96
        %v1434 = vpop.permute.xlu0 %1433
        %1435 = vrot.lane.b32.xlu0 %v1426, 96
        %v1436 = vpop.permute.xlu0 %1435
        %1437 = vrot.lane.b32.xlu0 %v1427, 96
        %v1438 = vpop.permute.xlu0 %1437
        %1439 = vrot.lane.b32.xlu0 %v1428, 96
        %v1440 = vpop.permute.xlu0 %1439
        %1441 = vrot.lane.b32.xlu0 %v1429, 96
        %v1442 = vpop.permute.xlu0 %1441
        %1443 = vrot.lane.b32.xlu0 %v1430, 96
        %v1444 = vpop.permute.xlu0 %1443
        %1445 = vrot.lane.b32.xlu0 %v1431, 96
        %v1446 = vpop.permute.xlu0 %1445
        %1447 = vrot.lane.b32.xlu0 %v1432, 96
        %v1448 = vpop.permute.xlu0 %1447
        %v1450 = vsel %vm1031, %v1375, 0
        %v1453 = vsel %vm1031, %v1376, 0
        %v1456 = vsel %vm1031, %v1434, 0
        %v1459 = vsel %vm1031, %v1436, 0
        %v1462 = vsel %vm1031, %v1438, 0
        %v1465 = vsel %vm1031, %v1440, 0
        %v1468 = vsel %vm1031, %v1442, 0
        %v1471 = vsel %vm1031, %v1444, 0
        %v1474 = vsel %vm1031, %v1446, 0
        %v1477 = vsel %vm1031, %v1448, 0
        %1479 = vmatpush.bf16.xpose.msra.mxu0 %v1477
        %1480 = vmatpush.bf16.xpose.msra.mxu0 %v1474
        %1481 = vmatpush.bf16.xpose.msra.mxu0 %v1471
        %1482 = vmatpush.bf16.xpose.msra.mxu0 %v1468
        %1483 = vmatpush.bf16.xpose.msra.mxu0 %v1465
        %1484 = vmatpush.bf16.xpose.msra.mxu0 %v1462
        %1485 = vmatpush.bf16.xpose.msra.mxu0 %v1459
        %1486 = vmatpush.bf16.xpose.msra.mxu0 %v1456
        %1487 = vmatmul.bf16.gmra.mxu0 %v1450
        %v1488 = vpop.f32.mrf.mxu0
        %v1489 = vadd.f32 0.0, %v1488
        %v1490 = vpop.f32.mrf.mxu0
        %v1491 = vadd.f32 0.0, %v1490
        %1492 = vmatmul.bf16.gmra.mxu0 %v1453
        %v1493 = vpop.f32.mrf.mxu0
        %v1494 = vadd.f32 0.0, %v1493
        %v1495 = vpop.f32.mrf.mxu0
        %v1496 = vadd.f32 0.0, %v1495
        %1497 = vdwg.mxu0
        %v1514 = vunpack.c.l.b16 %v1201
        %v1515 = vunpack.c.l.b16 %v1202
        %v1516 = vunpack.c.l.b16 %v1203
        %v1517 = vunpack.c.l.b16 %v1204
        %v1518 = vunpack.c.l.b16 %v1205
        %v1519 = vunpack.c.l.b16 %v1206
        %v1520 = vunpack.c.l.b16 %v1207
        %v1521 = vunpack.c.l.b16 %v1208
        %v1522 = vunpack.c.l.b16 %v1209
        %v1523 = vunpack.c.l.b16 %v1210
        %v1524 = vunpack.c.l.b16 %v1211
        %v1525 = vunpack.c.l.b16 %v1212
        %v1526 = vunpack.c.l.b16 %v1213
        %v1527 = vunpack.c.l.b16 %v1214
        %v1528 = vunpack.c.l.b16 %v1215
        %v1529 = vunpack.c.l.b16 %v1216
        %v1530 = vpack.c.b16 %v1515, %v1514
        %v1531 = vpack.c.b16 %v1517, %v1516
        %v1532 = vpack.c.b16 %v1519, %v1518
        %v1533 = vpack.c.b16 %v1521, %v1520
        %v1534 = vpack.c.b16 %v1523, %v1522
        %v1535 = vpack.c.b16 %v1525, %v1524
        %v1536 = vpack.c.b16 %v1527, %v1526
        %v1537 = vpack.c.b16 %v1529, %v1528
        %v1539 = vsel %vm1031, %v1199, 0
        %v1542 = vsel %vm1031, %v1200, 0
        %v1545 = vsel %vm1031, %v1530, 0
        %v1548 = vsel %vm1031, %v1531, 0
        %v1551 = vsel %vm1031, %v1532, 0
        %v1554 = vsel %vm1031, %v1533, 0
        %v1557 = vsel %vm1031, %v1534, 0
        %v1560 = vsel %vm1031, %v1535, 0
        %v1563 = vsel %vm1031, %v1536, 0
        %v1566 = vsel %vm1031, %v1537, 0
        %1568 = vmatpush.bf16.xpose.msra.mxu0 %v1566
        %1569 = vmatpush.bf16.xpose.msra.mxu0 %v1563
        %1570 = vmatpush.bf16.xpose.msra.mxu0 %v1560
        %1571 = vmatpush.bf16.xpose.msra.mxu0 %v1557
        %1572 = vmatpush.bf16.xpose.msra.mxu0 %v1554
        %1573 = vmatpush.bf16.xpose.msra.mxu0 %v1551
        %1574 = vmatpush.bf16.xpose.msra.mxu0 %v1548
        %1575 = vmatpush.bf16.xpose.msra.mxu0 %v1545
        %1576 = vmatmul.bf16.gmra.mxu0 %v1539
        %v1577 = vpop.f32.mrf.mxu0
        %v1578 = vadd.f32 %v1489, %v1577
        %v1579 = vpop.f32.mrf.mxu0
        %v1580 = vadd.f32 %v1491, %v1579
        %1581 = vmatmul.bf16.gmra.mxu0 %v1542
        %v1582 = vpop.f32.mrf.mxu0
        %v1583 = vadd.f32 %v1494, %v1582
        %v1584 = vpop.f32.mrf.mxu0
        %v1585 = vadd.f32 %v1496, %v1584
        %1586 = vdwg.mxu0
        %1587 = vrot.lane.b32.xlu0 %v1025, 64
        %v1588 = vpop.permute.xlu0 %1587
        %1589 = vrot.lane.b32.xlu0 %v1030, 64
        %v1590 = vpop.permute.xlu0 %1589
        %v1592 = vsel %vm1031, %v1588, 0
        %v1595 = vsel %vm1031, %v1590, 0
        %1597 = vmatpush.bf16.xpose.msra.mxu0 0
        %1598 = vmatpush.bf16.xpose.msra.mxu0 0
        %1599 = vmatpush.bf16.xpose.msra.mxu0 0
        %1600 = vmatpush.bf16.xpose.msra.mxu0 0
        %1601 = vmatpush.bf16.xpose.msra.mxu0 0
        %1602 = vmatpush.bf16.xpose.msra.mxu0 0
        %1603 = vmatpush.bf16.xpose.msra.mxu0 0
        %1604 = vmatpush.bf16.xpose.msra.mxu0 %v1595
        %1605 = vmatmul.bf16.gmra.mxu0 %v1592
        %v1606 = vpop.f32.mrf.mxu0
        %v1607 = vadd.f32 0.0, %v1606
        %v1608 = vpop.f32.mrf.mxu0
        %v1609 = vadd.f32 0.0, %v1608
        %1610 = vdwg.mxu0
        %1611 = vrot.lane.b32.xlu0 %v1056, 64
        %v1612 = vpop.permute.xlu0 %1611
        %1613 = vrot.lane.b32.xlu0 %v1061, 64
        %v1614 = vpop.permute.xlu0 %1613
        %v1616 = vsel %vm1031, %v1612, 0
        %v1619 = vsel %vm1031, %v1614, 0
        %1621 = vmatpush.bf16.xpose.msra.mxu0 0
        %1622 = vmatpush.bf16.xpose.msra.mxu0 0
        %1623 = vmatpush.bf16.xpose.msra.mxu0 0
        %1624 = vmatpush.bf16.xpose.msra.mxu0 0
        %1625 = vmatpush.bf16.xpose.msra.mxu0 0
        %1626 = vmatpush.bf16.xpose.msra.mxu0 0
        %1627 = vmatpush.bf16.xpose.msra.mxu0 0
        %1628 = vmatpush.bf16.xpose.msra.mxu0 %v1619
        %1629 = vmatmul.bf16.gmra.mxu0 %v1616
        %v1630 = vpop.f32.mrf.mxu0
        %v1631 = vadd.f32 0.0, %v1630
        %v1632 = vpop.f32.mrf.mxu0
        %v1633 = vadd.f32 0.0, %v1632
        %1634 = vdwg.mxu0
        %v1635 = vsel %vm1082, %v1607, -inf
        %1636 = vmax.xlane.f32.xlu0 %v1635
        %v1637 = vpop.xlane.xlu0 %1636
        %v1638 = vsel %vm1082, %v1609, -inf
        %1639 = vmax.xlane.f32.xlu0 %v1638
        %v1640 = vpop.xlane.xlu0 %1639
        %v1641 = vsel %vm1082, %v1631, -inf
        %1642 = vmax.xlane.f32.xlu0 %v1641
        %v1643 = vpop.xlane.xlu0 %1642
        %v1644 = vsel %vm1082, %v1633, -inf
        %1645 = vmax.xlane.f32.xlu0 %v1644
        %v1646 = vpop.xlane.xlu0 %1645
        %v1647 = vsub.f32 %v1607, %v1637
        %v1648 = vsub.f32 %v1609, %v1640
        %v1649 = vsub.f32 %v1631, %v1643
        %v1650 = vsub.f32 %v1633, %v1646
        %v1651 = vmul.f32 %v1647, 1.442695
        %v1652 = vpow.pop %v1651
        %v1653 = vmul.f32 %v1648, 1.442695
        %v1654 = vpow.pop %v1653
        %v1655 = vmul.f32 %v1649, 1.442695
        %v1656 = vpow.pop %v1655
        %v1657 = vmul.f32 %v1650, 1.442695
        %v1658 = vpow.pop %v1657
        %v1659 = vsel %vm1082, %v1652, 0.0
        %1660 = vadd.xlane.f32.xlu0 %v1659
        %v1661 = vpop.xlane.xlu0 %1660
        %v1662 = vsel %vm1082, %v1654, 0.0
        %1663 = vadd.xlane.f32.xlu0 %v1662
        %v1664 = vpop.xlane.xlu0 %1663
        %v1665 = vsel %vm1082, %v1656, 0.0
        %1666 = vadd.xlane.f32.xlu0 %v1665
        %v1667 = vpop.xlane.xlu0 %1666
        %v1668 = vsel %vm1082, %v1658, 0.0
        %1669 = vadd.xlane.f32.xlu0 %v1668
        %v1670 = vpop.xlane.xlu0 %1669
        %v1671 = vrcp.pop %v1661
        %v1672 = vrcp.pop %v1664
        %v1673 = vrcp.pop %v1667
        %v1674 = vrcp.pop %v1670
        %v1675 = vmul.f32 %v1661, %v1671
        %v1676 = vmul.f32 %v1664, %v1672
        %v1677 = vmul.f32 %v1667, %v1673
        %v1678 = vmul.f32 %v1670, %v1674
        %v1679 = vsub.f32 2.0, %v1675
        %v1680 = vsub.f32 2.0, %v1676
        %v1681 = vsub.f32 2.0, %v1677
        %v1682 = vsub.f32 2.0, %v1678
        %v1683 = vmul.f32 %v1671, %v1679
        %v1684 = vmul.f32 %v1672, %v1680
        %v1685 = vmul.f32 %v1673, %v1681
        %v1686 = vmul.f32 %v1674, %v1682
        %v1687 = vmul.f32 %v1652, %v1683
        %v1688 = vmul.f32 %v1654, %v1684
        %v1689 = vmul.f32 %v1656, %v1685
        %v1690 = vmul.f32 %v1658, %v1686
        %v1691 = vpack.c.bf16 %v1687, %v1687
        %v1692 = vpack.c.bf16 %v1688, %v1688
        %v1693 = vpack.c.bf16 %v1689, %v1689
        %v1694 = vpack.c.bf16 %v1690, %v1690
        %v1697 = vunpack.c.l.b16 %v1691
        %v1698 = vunpack.c.l.b16 %v1692
        %v1699 = vpack.c.b16 %v1698, %v1697
        %1700 = vrot.lane.b32.xlu0 %v1152, 64
        %v1701 = vpop.permute.xlu0 %1700
        %v1704 = vsel %vm1082, %v1699, 0
        %1706 = vmatpush.bf16.msra.mxu0 0
        %1707 = vmatpush.bf16.msra.mxu0 0
        %1708 = vmatpush.bf16.msra.mxu0 0
        %1709 = vmatpush.bf16.msra.mxu0 0
        %1710 = vmatpush.bf16.msra.mxu0 0
        %1711 = vmatpush.bf16.msra.mxu0 0
        %1712 = vmatpush.bf16.msra.mxu0 0
        %1713 = vmatpush.bf16.msra.mxu0 %v1701
        %1714 = vmatmul.bf16.gmra.mxu0 %v1704
        %v1715 = vpop.f32.mrf.mxu0
        %v1716 = vadd.f32 0.0, %v1715
        %v1717 = vpop.f32.mrf.mxu0
        %v1718 = vadd.f32 0.0, %v1717
        %1719 = vdwg.mxu0
        %v1722 = vunpack.c.l.b16 %v1693
        %v1723 = vunpack.c.l.b16 %v1694
        %v1724 = vpack.c.b16 %v1723, %v1722
        %1725 = vrot.lane.b32.xlu0 %v1180, 64
        %v1726 = vpop.permute.xlu0 %1725
        %v1729 = vsel %vm1082, %v1724, 0
        %1731 = vmatpush.bf16.msra.mxu0 0
        %1732 = vmatpush.bf16.msra.mxu0 0
        %1733 = vmatpush.bf16.msra.mxu0 0
        %1734 = vmatpush.bf16.msra.mxu0 0
        %1735 = vmatpush.bf16.msra.mxu0 0
        %1736 = vmatpush.bf16.msra.mxu0 0
        %1737 = vmatpush.bf16.msra.mxu0 0
        %1738 = vmatpush.bf16.msra.mxu0 %v1726
        %1739 = vmatmul.bf16.gmra.mxu0 %v1729
        %v1740 = vpop.f32.mrf.mxu0
        %v1741 = vadd.f32 0.0, %v1740
        %v1742 = vpop.f32.mrf.mxu0
        %v1743 = vadd.f32 0.0, %v1742
        %1744 = vdwg.mxu0
        %v1745 = vpack.c.bf16 %v1718, %v1716
        %v1746 = vpack.c.bf16 %v1743, %v1741
        %v1747 = vld [vmem:[#allocation10] sm:$0xf]
        %v1748 = vld [vmem:[#allocation10 + $0x4] sm:$0xf]
        %v1749 = vld [vmem:[#allocation10 + $0x8] sm:$0xf]
        %v1750 = vld [vmem:[#allocation10 + $0xc] sm:$0xf]
        %v1751 = vld [vmem:[#allocation10 + $0x10] sm:$0xf]
        %v1752 = vld [vmem:[#allocation10 + $0x14] sm:$0xf]
        %v1753 = vld [vmem:[#allocation10 + $0x18] sm:$0xf]
        %v1754 = vld [vmem:[#allocation10 + $0x1c] sm:$0xf]
        %v1755 = vld [vmem:[#allocation10 + $0x20] sm:$0xf]
        %v1756 = vld [vmem:[#allocation10 + $0x24] sm:$0xf]
        %v1757 = vld [vmem:[#allocation10 + $0x28] sm:$0xf]
        %v1758 = vld [vmem:[#allocation10 + $0x2c] sm:$0xf]
        %v1759 = vld [vmem:[#allocation10 + $0x30] sm:$0xf]
        %v1760 = vld [vmem:[#allocation10 + $0x34] sm:$0xf]
        %v1761 = vld [vmem:[#allocation10 + $0x38] sm:$0xf]
        %v1762 = vld [vmem:[#allocation10 + $0x3c] sm:$0xf]
        %v1779 = vunpack.c.l.b16 %v1747
        %v1780 = vunpack.c.l.b16 %v1748
        %v1781 = vunpack.c.l.b16 %v1749
        %v1782 = vunpack.c.l.b16 %v1750
        %v1783 = vunpack.c.l.b16 %v1751
        %v1784 = vunpack.c.l.b16 %v1752
        %v1785 = vunpack.c.l.b16 %v1753
        %v1786 = vunpack.c.l.b16 %v1754
        %v1787 = vunpack.c.l.b16 %v1755
        %v1788 = vunpack.c.l.b16 %v1756
        %v1789 = vunpack.c.l.b16 %v1757
        %v1790 = vunpack.c.l.b16 %v1758
        %v1791 = vunpack.c.l.b16 %v1759
        %v1792 = vunpack.c.l.b16 %v1760
        %v1793 = vunpack.c.l.b16 %v1761
        %v1794 = vunpack.c.l.b16 %v1762
        %v1795 = vpack.c.b16 %v1780, %v1779
        %v1796 = vpack.c.b16 %v1782, %v1781
        %v1797 = vpack.c.b16 %v1784, %v1783
        %v1798 = vpack.c.b16 %v1786, %v1785
        %v1799 = vpack.c.b16 %v1788, %v1787
        %v1800 = vpack.c.b16 %v1790, %v1789
        %v1801 = vpack.c.b16 %v1792, %v1791
        %v1802 = vpack.c.b16 %v1794, %v1793
        %1803 = vrot.lane.b32.xlu0 %v1795, 64
        %v1804 = vpop.permute.xlu0 %1803
        %1805 = vrot.lane.b32.xlu0 %v1796, 64
        %v1806 = vpop.permute.xlu0 %1805
        %1807 = vrot.lane.b32.xlu0 %v1797, 64
        %v1808 = vpop.permute.xlu0 %1807
        %1809 = vrot.lane.b32.xlu0 %v1798, 64
        %v1810 = vpop.permute.xlu0 %1809
        %1811 = vrot.lane.b32.xlu0 %v1799, 64
        %v1812 = vpop.permute.xlu0 %1811
        %1813 = vrot.lane.b32.xlu0 %v1800, 64
        %v1814 = vpop.permute.xlu0 %1813
        %1815 = vrot.lane.b32.xlu0 %v1801, 64
        %v1816 = vpop.permute.xlu0 %1815
        %1817 = vrot.lane.b32.xlu0 %v1802, 64
        %v1818 = vpop.permute.xlu0 %1817
        %v1820 = vsel %vm1031, %v1745, 0
        %v1823 = vsel %vm1031, %v1746, 0
        %v1826 = vsel %vm1031, %v1804, 0
        %v1829 = vsel %vm1031, %v1806, 0
        %v1832 = vsel %vm1031, %v1808, 0
        %v1835 = vsel %vm1031, %v1810, 0
        %v1838 = vsel %vm1031, %v1812, 0
        %v1841 = vsel %vm1031, %v1814, 0
        %v1844 = vsel %vm1031, %v1816, 0
        %v1847 = vsel %vm1031, %v1818, 0
        %1849 = vmatpush.bf16.xpose.msra.mxu0 %v1847
        %1850 = vmatpush.bf16.xpose.msra.mxu0 %v1844
        %1851 = vmatpush.bf16.xpose.msra.mxu0 %v1841
        %1852 = vmatpush.bf16.xpose.msra.mxu0 %v1838
        %1853 = vmatpush.bf16.xpose.msra.mxu0 %v1835
        %1854 = vmatpush.bf16.xpose.msra.mxu0 %v1832
        %1855 = vmatpush.bf16.xpose.msra.mxu0 %v1829
        %1856 = vmatpush.bf16.xpose.msra.mxu0 %v1826
        %1857 = vmatmul.bf16.gmra.mxu0 %v1820
        %v1858 = vpop.f32.mrf.mxu0
        %v1859 = vadd.f32 0.0, %v1858
        %v1860 = vpop.f32.mrf.mxu0
        %v1861 = vadd.f32 0.0, %v1860
        %1862 = vmatmul.bf16.gmra.mxu0 %v1823
        %v1863 = vpop.f32.mrf.mxu0
        %v1864 = vadd.f32 0.0, %v1863
        %v1865 = vpop.f32.mrf.mxu0
        %v1866 = vadd.f32 0.0, %v1865
        %1867 = vdwg.mxu0
        %v1868 = vadd.f32 %v1578, %v1859
        %v1869 = vadd.f32 %v1580, %v1861
        %v1870 = vadd.f32 %v1583, %v1864
        %v1871 = vadd.f32 %v1585, %v1866
        %1872 = vrot.lane.b32.xlu0 %v1025, 32
        %v1873 = vpop.permute.xlu0 %1872
        %1874 = vrot.lane.b32.xlu0 %v1030, 32
        %v1875 = vpop.permute.xlu0 %1874
        %v1877 = vsel %vm1031, %v1873, 0
        %v1880 = vsel %vm1031, %v1875, 0
        %1882 = vmatpush.bf16.xpose.msra.mxu0 0
        %1883 = vmatpush.bf16.xpose.msra.mxu0 0
        %1884 = vmatpush.bf16.xpose.msra.mxu0 0
        %1885 = vmatpush.bf16.xpose.msra.mxu0 0
        %1886 = vmatpush.bf16.xpose.msra.mxu0 0
        %1887 = vmatpush.bf16.xpose.msra.mxu0 0
        %1888 = vmatpush.bf16.xpose.msra.mxu0 0
        %1889 = vmatpush.bf16.xpose.msra.mxu0 %v1880
        %1890 = vmatmul.bf16.gmra.mxu0 %v1877
        %v1891 = vpop.f32.mrf.mxu0
        %v1892 = vadd.f32 0.0, %v1891
        %v1893 = vpop.f32.mrf.mxu0
        %v1894 = vadd.f32 0.0, %v1893
        %1895 = vdwg.mxu0
        %1896 = vrot.lane.b32.xlu0 %v1056, 32
        %v1897 = vpop.permute.xlu0 %1896
        %1898 = vrot.lane.b32.xlu0 %v1061, 32
        %v1899 = vpop.permute.xlu0 %1898
        %v1901 = vsel %vm1031, %v1897, 0
        %v1904 = vsel %vm1031, %v1899, 0
        %1906 = vmatpush.bf16.xpose.msra.mxu0 0
        %1907 = vmatpush.bf16.xpose.msra.mxu0 0
        %1908 = vmatpush.bf16.xpose.msra.mxu0 0
        %1909 = vmatpush.bf16.xpose.msra.mxu0 0
        %1910 = vmatpush.bf16.xpose.msra.mxu0 0
        %1911 = vmatpush.bf16.xpose.msra.mxu0 0
        %1912 = vmatpush.bf16.xpose.msra.mxu0 0
        %1913 = vmatpush.bf16.xpose.msra.mxu0 %v1904
        %1914 = vmatmul.bf16.gmra.mxu0 %v1901
        %v1915 = vpop.f32.mrf.mxu0
        %v1916 = vadd.f32 0.0, %v1915
        %v1917 = vpop.f32.mrf.mxu0
        %v1918 = vadd.f32 0.0, %v1917
        %1919 = vdwg.mxu0
        %v1920 = vsel %vm1082, %v1892, -inf
        %1921 = vmax.xlane.f32.xlu0 %v1920
        %v1922 = vpop.xlane.xlu0 %1921
        %v1923 = vsel %vm1082, %v1894, -inf
        %1924 = vmax.xlane.f32.xlu0 %v1923
        %v1925 = vpop.xlane.xlu0 %1924
        %v1926 = vsel %vm1082, %v1916, -inf
        %1927 = vmax.xlane.f32.xlu0 %v1926
        %v1928 = vpop.xlane.xlu0 %1927
        %v1929 = vsel %vm1082, %v1918, -inf
        %1930 = vmax.xlane.f32.xlu0 %v1929
        %v1931 = vpop.xlane.xlu0 %1930
        %v1932 = vsub.f32 %v1892, %v1922
        %v1933 = vsub.f32 %v1894, %v1925
        %v1934 = vsub.f32 %v1916, %v1928
        %v1935 = vsub.f32 %v1918, %v1931
        %v1936 = vmul.f32 %v1932, 1.442695
        %v1937 = vpow.pop %v1936
        %v1938 = vmul.f32 %v1933, 1.442695
        %v1939 = vpow.pop %v1938
        %v1940 = vmul.f32 %v1934, 1.442695
        %v1941 = vpow.pop %v1940
        %v1942 = vmul.f32 %v1935, 1.442695
        %v1943 = vpow.pop %v1942
        %v1944 = vsel %vm1082, %v1937, 0.0
        %1945 = vadd.xlane.f32.xlu0 %v1944
        %v1946 = vpop.xlane.xlu0 %1945
        %v1947 = vsel %vm1082, %v1939, 0.0
        %1948 = vadd.xlane.f32.xlu0 %v1947
        %v1949 = vpop.xlane.xlu0 %1948
        %v1950 = vsel %vm1082, %v1941, 0.0
        %1951 = vadd.xlane.f32.xlu0 %v1950
        %v1952 = vpop.xlane.xlu0 %1951
        %v1953 = vsel %vm1082, %v1943, 0.0
        %1954 = vadd.xlane.f32.xlu0 %v1953
        %v1955 = vpop.xlane.xlu0 %1954
        %v1956 = vrcp.pop %v1946
        %v1957 = vrcp.pop %v1949
        %v1958 = vrcp.pop %v1952
        %v1959 = vrcp.pop %v1955
        %v1960 = vmul.f32 %v1946, %v1956
        %v1961 = vmul.f32 %v1949, %v1957
        %v1962 = vmul.f32 %v1952, %v1958
        %v1963 = vmul.f32 %v1955, %v1959
        %v1964 = vsub.f32 2.0, %v1960
        %v1965 = vsub.f32 2.0, %v1961
        %v1966 = vsub.f32 2.0, %v1962
        %v1967 = vsub.f32 2.0, %v1963
        %v1968 = vmul.f32 %v1956, %v1964
        %v1969 = vmul.f32 %v1957, %v1965
        %v1970 = vmul.f32 %v1958, %v1966
        %v1971 = vmul.f32 %v1959, %v1967
        %v1972 = vmul.f32 %v1937, %v1968
        %v1973 = vmul.f32 %v1939, %v1969
        %v1974 = vmul.f32 %v1941, %v1970
        %v1975 = vmul.f32 %v1943, %v1971
        %v1976 = vpack.c.bf16 %v1972, %v1972
        %v1977 = vpack.c.bf16 %v1973, %v1973
        %v1978 = vpack.c.bf16 %v1974, %v1974
        %v1979 = vpack.c.bf16 %v1975, %v1975
        %v1982 = vunpack.c.l.b16 %v1976
        %v1983 = vunpack.c.l.b16 %v1977
        %v1984 = vpack.c.b16 %v1983, %v1982
        %1985 = vrot.lane.b32.xlu0 %v1152, 32
        %v1986 = vpop.permute.xlu0 %1985
        %v1989 = vsel %vm1082, %v1984, 0
        %1991 = vmatpush.bf16.msra.mxu0 0
        %1992 = vmatpush.bf16.msra.mxu0 0
        %1993 = vmatpush.bf16.msra.mxu0 0
        %1994 = vmatpush.bf16.msra.mxu0 0
        %1995 = vmatpush.bf16.msra.mxu0 0
        %1996 = vmatpush.bf16.msra.mxu0 0
        %1997 = vmatpush.bf16.msra.mxu0 0
        %1998 = vmatpush.bf16.msra.mxu0 %v1986
        %1999 = vmatmul.bf16.gmra.mxu0 %v1989
        %v2000 = vpop.f32.mrf.mxu0
        %v2001 = vadd.f32 0.0, %v2000
        %v2002 = vpop.f32.mrf.mxu0
        %v2003 = vadd.f32 0.0, %v2002
        %2004 = vdwg.mxu0
        %v2007 = vunpack.c.l.b16 %v1978
        %v2008 = vunpack.c.l.b16 %v1979
        %v2009 = vpack.c.b16 %v2008, %v2007
        %2010 = vrot.lane.b32.xlu0 %v1180, 32
        %v2011 = vpop.permute.xlu0 %2010
        %v2014 = vsel %vm1082, %v2009, 0
        %2016 = vmatpush.bf16.msra.mxu0 0
        %2017 = vmatpush.bf16.msra.mxu0 0
        %2018 = vmatpush.bf16.msra.mxu0 0
        %2019 = vmatpush.bf16.msra.mxu0 0
        %2020 = vmatpush.bf16.msra.mxu0 0
        %2021 = vmatpush.bf16.msra.mxu0 0
        %2022 = vmatpush.bf16.msra.mxu0 0
        %2023 = vmatpush.bf16.msra.mxu0 %v2011
        %2024 = vmatmul.bf16.gmra.mxu0 %v2014
        %v2025 = vpop.f32.mrf.mxu0
        %v2026 = vadd.f32 0.0, %v2025
        %v2027 = vpop.f32.mrf.mxu0
        %v2028 = vadd.f32 0.0, %v2027
        %2029 = vdwg.mxu0
        %v2030 = vpack.c.bf16 %v2003, %v2001
        %v2031 = vpack.c.bf16 %v2028, %v2026
        %v2032 = vld [vmem:[#allocation10] sm:$0xf]
        %v2033 = vld [vmem:[#allocation10 + $0x4] sm:$0xf]
        %v2034 = vld [vmem:[#allocation10 + $0x8] sm:$0xf]
        %v2035 = vld [vmem:[#allocation10 + $0xc] sm:$0xf]
        %v2036 = vld [vmem:[#allocation10 + $0x10] sm:$0xf]
        %v2037 = vld [vmem:[#allocation10 + $0x14] sm:$0xf]
        %v2038 = vld [vmem:[#allocation10 + $0x18] sm:$0xf]
        %v2039 = vld [vmem:[#allocation10 + $0x1c] sm:$0xf]
        %v2040 = vld [vmem:[#allocation10 + $0x20] sm:$0xf]
        %v2041 = vld [vmem:[#allocation10 + $0x24] sm:$0xf]
        %v2042 = vld [vmem:[#allocation10 + $0x28] sm:$0xf]
        %v2043 = vld [vmem:[#allocation10 + $0x2c] sm:$0xf]
        %v2044 = vld [vmem:[#allocation10 + $0x30] sm:$0xf]
        %v2045 = vld [vmem:[#allocation10 + $0x34] sm:$0xf]
        %v2046 = vld [vmem:[#allocation10 + $0x38] sm:$0xf]
        %v2047 = vld [vmem:[#allocation10 + $0x3c] sm:$0xf]
        %v2064 = vunpack.c.l.b16 %v2032
        %v2065 = vunpack.c.l.b16 %v2033
        %v2066 = vunpack.c.l.b16 %v2034
        %v2067 = vunpack.c.l.b16 %v2035
        %v2068 = vunpack.c.l.b16 %v2036
        %v2069 = vunpack.c.l.b16 %v2037
        %v2070 = vunpack.c.l.b16 %v2038
        %v2071 = vunpack.c.l.b16 %v2039
        %v2072 = vunpack.c.l.b16 %v2040
        %v2073 = vunpack.c.l.b16 %v2041
        %v2074 = vunpack.c.l.b16 %v2042
        %v2075 = vunpack.c.l.b16 %v2043
        %v2076 = vunpack.c.l.b16 %v2044
        %v2077 = vunpack.c.l.b16 %v2045
        %v2078 = vunpack.c.l.b16 %v2046
        %v2079 = vunpack.c.l.b16 %v2047
        %v2080 = vpack.c.b16 %v2065, %v2064
        %v2081 = vpack.c.b16 %v2067, %v2066
        %v2082 = vpack.c.b16 %v2069, %v2068
        %v2083 = vpack.c.b16 %v2071, %v2070
        %v2084 = vpack.c.b16 %v2073, %v2072
        %v2085 = vpack.c.b16 %v2075, %v2074
        %v2086 = vpack.c.b16 %v2077, %v2076
        %v2087 = vpack.c.b16 %v2079, %v2078
        %2088 = vrot.lane.b32.xlu0 %v2080, 32
        %v2089 = vpop.permute.xlu0 %2088
        %2090 = vrot.lane.b32.xlu0 %v2081, 32
        %v2091 = vpop.permute.xlu0 %2090
        %2092 = vrot.lane.b32.xlu0 %v2082, 32
        %v2093 = vpop.permute.xlu0 %2092
        %2094 = vrot.lane.b32.xlu0 %v2083, 32
        %v2095 = vpop.permute.xlu0 %2094
        %2096 = vrot.lane.b32.xlu0 %v2084, 32
        %v2097 = vpop.permute.xlu0 %2096
        %2098 = vrot.lane.b32.xlu0 %v2085, 32
        %v2099 = vpop.permute.xlu0 %2098
        %2100 = vrot.lane.b32.xlu0 %v2086, 32
        %v2101 = vpop.permute.xlu0 %2100
        %2102 = vrot.lane.b32.xlu0 %v2087, 32
        %v2103 = vpop.permute.xlu0 %2102
        %v2105 = vsel %vm1031, %v2030, 0
        %v2108 = vsel %vm1031, %v2031, 0
        %v2111 = vsel %vm1031, %v2089, 0
        %v2114 = vsel %vm1031, %v2091, 0
        %v2117 = vsel %vm1031, %v2093, 0
        %v2120 = vsel %vm1031, %v2095, 0
        %v2123 = vsel %vm1031, %v2097, 0
        %v2126 = vsel %vm1031, %v2099, 0
        %v2129 = vsel %vm1031, %v2101, 0
        %v2132 = vsel %vm1031, %v2103, 0
        %2134 = vmatpush.bf16.xpose.msra.mxu0 %v2132
        %2135 = vmatpush.bf16.xpose.msra.mxu0 %v2129
        %2136 = vmatpush.bf16.xpose.msra.mxu0 %v2126
        %2137 = vmatpush.bf16.xpose.msra.mxu0 %v2123
        %2138 = vmatpush.bf16.xpose.msra.mxu0 %v2120
        %2139 = vmatpush.bf16.xpose.msra.mxu0 %v2117
        %2140 = vmatpush.bf16.xpose.msra.mxu0 %v2114
        %2141 = vmatpush.bf16.xpose.msra.mxu0 %v2111
        %2142 = vmatmul.bf16.gmra.mxu0 %v2105
        %v2143 = vpop.f32.mrf.mxu0
        %v2144 = vadd.f32 0.0, %v2143
        %v2145 = vpop.f32.mrf.mxu0
        %v2146 = vadd.f32 0.0, %v2145
        %2147 = vmatmul.bf16.gmra.mxu0 %v2108
        %v2148 = vpop.f32.mrf.mxu0
        %v2149 = vadd.f32 0.0, %v2148
        %v2150 = vpop.f32.mrf.mxu0
        %v2151 = vadd.f32 0.0, %v2150
        %2152 = vdwg.mxu0
        %v2153 = vadd.f32 %v1868, %v2144
        %v2154 = vadd.f32 %v1869, %v2146
        %v2155 = vadd.f32 %v1870, %v2149
        %v2156 = vadd.f32 %v1871, %v2151
        %v2157 = vadd.f32 %v575, %v2153
        %v2158 = vadd.f32 %v576, %v2154
        %v2159 = vadd.f32 %v577, %v2155
        %v2160 = vadd.f32 %v578, %v2156
        %v2161 = vld [vmem:[#allocation11] sm:$0x1]
        %v2163 = vperm.slane %v2161, 0
        %v2165 = vadd.f32 %v2157, %v2163
        %v2166 = vadd.f32 %v2158, %v2163
        %v2167 = vadd.f32 %v2159, %v2163
        %v2168 = vadd.f32 %v2160, %v2163
        %2169 = vadd.xlane.f32.xlu0 %v2165
        %v2170 = vpop.xlane.xlu0 %2169
        %2171 = vadd.xlane.f32.xlu0 %v2166
        %v2172 = vpop.xlane.xlu0 %2171
        %2173 = vadd.xlane.f32.xlu0 %v2167
        %v2174 = vpop.xlane.xlu0 %2173
        %2175 = vadd.xlane.f32.xlu0 %v2168
        %v2176 = vpop.xlane.xlu0 %2175
        %v2177 = vmul.f32 %v2170, %v593
        %v2178 = vmul.f32 %v2172, %v593
        %v2179 = vmul.f32 %v2174, %v593
        %v2180 = vmul.f32 %v2176, %v593
        %v2181 = vsub.f32 %v2165, %v2177
        %v2182 = vsub.f32 %v2166, %v2178
        %v2183 = vsub.f32 %v2167, %v2179
        %v2184 = vsub.f32 %v2168, %v2180
        %v2185 = vmul.f32 %v2181, %v2181
        %v2186 = vmul.f32 %v2182, %v2182
        %v2187 = vmul.f32 %v2183, %v2183
        %v2188 = vmul.f32 %v2184, %v2184
        %2189 = vadd.xlane.f32.xlu0 %v2185
        %v2190 = vpop.xlane.xlu0 %2189
        %2191 = vadd.xlane.f32.xlu0 %v2186
        %v2192 = vpop.xlane.xlu0 %2191
        %2193 = vadd.xlane.f32.xlu0 %v2187
        %v2194 = vpop.xlane.xlu0 %2193
        %2195 = vadd.xlane.f32.xlu0 %v2188
        %v2196 = vpop.xlane.xlu0 %2195
        %v2197 = vmul.f32 %v2190, 0.007874016
        %v2198 = vmul.f32 %v2192, 0.007874016
        %v2199 = vmul.f32 %v2194, 0.007874016
        %v2200 = vmul.f32 %v2196, 0.007874016
        %v2201 = vrsqrt.pop %v2197
        %v2202 = vmul.f32 %v2201, %v2197
        %v2203 = vmul.f32 %v2202, %v2201
        %v2204 = vmul.f32 0.5, %v2203
        %v2205 = vsub.f32 1.5, %v2204
        %v2206 = vmul.f32 %v2201, %v2205
        %v2207 = vmul.f32 %v2197, %v2206
        %vm2208 = vcmp.eq.f32.partialorder %v2197, inf
        %v2209 = vsel %vm2208, %v2197, %v2207
        %vm2210 = vcmp.eq.f32.partialorder %v2197, 0.0
        %v2211 = vand.u32 %v2197, 2147483648
        %v2212 = vsel %vm2210, %v2211, %v2209
        %v2213 = vrsqrt.pop %v2198
        %v2214 = vmul.f32 %v2213, %v2198
        %v2215 = vmul.f32 %v2214, %v2213
        %v2216 = vmul.f32 0.5, %v2215
        %v2217 = vsub.f32 1.5, %v2216
        %v2218 = vmul.f32 %v2213, %v2217
        %v2219 = vmul.f32 %v2198, %v2218
        %vm2220 = vcmp.eq.f32.partialorder %v2198, inf
        %v2221 = vsel %vm2220, %v2198, %v2219
        %vm2222 = vcmp.eq.f32.partialorder %v2198, 0.0
        %v2223 = vand.u32 %v2198, 2147483648
        %v2224 = vsel %vm2222, %v2223, %v2221
        %v2225 = vrsqrt.pop %v2199
        %v2226 = vmul.f32 %v2225, %v2199
        %v2227 = vmul.f32 %v2226, %v2225
        %v2228 = vmul.f32 0.5, %v2227
        %v2229 = vsub.f32 1.5, %v2228
        %v2230 = vmul.f32 %v2225, %v2229
        %v2231 = vmul.f32 %v2199, %v2230
        %vm2232 = vcmp.eq.f32.partialorder %v2199, inf
        %v2233 = vsel %vm2232, %v2199, %v2231
        %vm2234 = vcmp.eq.f32.partialorder %v2199, 0.0
        %v2235 = vand.u32 %v2199, 2147483648
        %v2236 = vsel %vm2234, %v2235, %v2233
        %v2237 = vrsqrt.pop %v2200
        %v2238 = vmul.f32 %v2237, %v2200
        %v2239 = vmul.f32 %v2238, %v2237
        %v2240 = vmul.f32 0.5, %v2239
        %v2241 = vsub.f32 1.5, %v2240
        %v2242 = vmul.f32 %v2237, %v2241
        %v2243 = vmul.f32 %v2200, %v2242
        %vm2244 = vcmp.eq.f32.partialorder %v2200, inf
        %v2245 = vsel %vm2244, %v2200, %v2243
        %vm2246 = vcmp.eq.f32.partialorder %v2200, 0.0
        %v2247 = vand.u32 %v2200, 2147483648
        %v2248 = vsel %vm2246, %v2247, %v2245
        %v2249 = vld [vmem:[%s7] sm:$0x1]
        %v2251 = vperm.slane %v2249, 0
        %v2253 = vmul.f32 %v2251, %v2181
        %v2254 = vmul.f32 %v2251, %v2182
        %v2255 = vmul.f32 %v2251, %v2183
        %v2256 = vmul.f32 %v2251, %v2184
        %v2257 = vadd.f32 %v2212, 1e-06
        %v2258 = vadd.f32 %v2224, 1e-06
        %v2259 = vadd.f32 %v2236, 1e-06
        %v2260 = vadd.f32 %v2248, 1e-06
        %v2261 = vrcp.pop %v2257
        %v2262 = vmul.f32 %v2257, %v2261
        %v2263 = vsub.f32 1.0, %v2262
        %v2264 = vmul.f32 %v2261, %v2263
        %v2265 = vadd.f32 %v2261, %v2264
        %vm2266 = vweird.f32 %v2257
        %vm2267 = vweird.f32 %v2261
        %vm2268 = vmor %vm2266, %vm2267
        %v2269 = vsel %vm2268, %v2261, %v2265
        %v2270 = vand.u32 2147483647, %v2257
        %vm2271 = vcmp.eq.f32.partialorder %v2270, 8.507059e+37
        %v2272 = vand.u32 %v2257, 2147483648
        %v2273 = vor.u32 1.1754944e-38, %v2272
        %v2274 = vsel %vm2271, %v2273, %v2269
        %v2275 = vmul.f32 %v2253, %v2274
        %v2276 = vrcp.pop %v2258
        %v2277 = vmul.f32 %v2258, %v2276
        %v2278 = vsub.f32 1.0, %v2277
        %v2279 = vmul.f32 %v2276, %v2278
        %v2280 = vadd.f32 %v2276, %v2279
        %vm2281 = vweird.f32 %v2258
        %vm2282 = vweird.f32 %v2276
        %vm2283 = vmor %vm2281, %vm2282
        %v2284 = vsel %vm2283, %v2276, %v2280
        %v2285 = vand.u32 2147483647, %v2258
        %vm2286 = vcmp.eq.f32.partialorder %v2285, 8.507059e+37
        %v2287 = vand.u32 %v2258, 2147483648
        %v2288 = vor.u32 1.1754944e-38, %v2287
        %v2289 = vsel %vm2286, %v2288, %v2284
        %v2290 = vmul.f32 %v2254, %v2289
        %v2291 = vrcp.pop %v2259
        %v2292 = vmul.f32 %v2259, %v2291
        %v2293 = vsub.f32 1.0, %v2292
        %v2294 = vmul.f32 %v2291, %v2293
        %v2295 = vadd.f32 %v2291, %v2294
        %vm2296 = vweird.f32 %v2259
        %vm2297 = vweird.f32 %v2291
        %vm2298 = vmor %vm2296, %vm2297
        %v2299 = vsel %vm2298, %v2291, %v2295
        %v2300 = vand.u32 2147483647, %v2259
        %vm2301 = vcmp.eq.f32.partialorder %v2300, 8.507059e+37
        %v2302 = vand.u32 %v2259, 2147483648
        %v2303 = vor.u32 1.1754944e-38, %v2302
        %v2304 = vsel %vm2301, %v2303, %v2299
        %v2305 = vmul.f32 %v2255, %v2304
        %v2306 = vrcp.pop %v2260
        %v2307 = vmul.f32 %v2260, %v2306
        %v2308 = vsub.f32 1.0, %v2307
        %v2309 = vmul.f32 %v2306, %v2308
        %v2310 = vadd.f32 %v2306, %v2309
        %vm2311 = vweird.f32 %v2260
        %vm2312 = vweird.f32 %v2306
        %vm2313 = vmor %vm2311, %vm2312
        %v2314 = vsel %vm2313, %v2306, %v2310
        %v2315 = vand.u32 2147483647, %v2260
        %vm2316 = vcmp.eq.f32.partialorder %v2315, 8.507059e+37
        %v2317 = vand.u32 %v2260, 2147483648
        %v2318 = vor.u32 1.1754944e-38, %v2317
        %v2319 = vsel %vm2316, %v2318, %v2314
        %v2320 = vmul.f32 %v2256, %v2319
        %v2321 = vld [vmem:[%s8] sm:$0x1]
        %v2323 = vperm.slane %v2321, 0
        %v2325 = vadd.f32 %v2275, %v2323
        %v2326 = vadd.f32 %v2290, %v2323
        %v2327 = vadd.f32 %v2305, %v2323
        %v2328 = vadd.f32 %v2320, %v2323
        %v2329 = vpack.c.bf16 %v2326, %v2325
        %v2330 = vpack.c.bf16 %v2328, %v2327
        %v2331 = vld [vmem:[#allocation13] sm:$0xf]
        %v2332 = vld [vmem:[#allocation13 + $0x4] sm:$0xf]
        %v2333 = vld [vmem:[#allocation13 + $0x8] sm:$0xf]
        %v2334 = vld [vmem:[#allocation13 + $0xc] sm:$0xf]
        %v2335 = vld [vmem:[#allocation13 + $0x10] sm:$0xf]
        %v2336 = vld [vmem:[#allocation13 + $0x14] sm:$0xf]
        %v2337 = vld [vmem:[#allocation13 + $0x18] sm:$0xf]
        %v2338 = vld [vmem:[#allocation13 + $0x1c] sm:$0xf]
        %v2339 = vld [vmem:[#allocation13 + $0x20] sm:$0xf]
        %v2340 = vld [vmem:[#allocation13 + $0x24] sm:$0xf]
        %v2341 = vld [vmem:[#allocation13 + $0x28] sm:$0xf]
        %v2342 = vld [vmem:[#allocation13 + $0x2c] sm:$0xf]
        %v2343 = vld [vmem:[#allocation13 + $0x30] sm:$0xf]
        %v2344 = vld [vmem:[#allocation13 + $0x34] sm:$0xf]
        %v2345 = vld [vmem:[#allocation13 + $0x38] sm:$0xf]
        %v2346 = vld [vmem:[#allocation13 + $0x3c] sm:$0xf]
        %v2347 = vld [vmem:[#allocation13 + $0x40] sm:$0xf]
        %v2348 = vld [vmem:[#allocation13 + $0x44] sm:$0xf]
        %v2349 = vld [vmem:[#allocation13 + $0x48] sm:$0xf]
        %v2350 = vld [vmem:[#allocation13 + $0x4c] sm:$0xf]
        %v2351 = vld [vmem:[#allocation13 + $0x50] sm:$0xf]
        %v2352 = vld [vmem:[#allocation13 + $0x54] sm:$0xf]
        %v2353 = vld [vmem:[#allocation13 + $0x58] sm:$0xf]
        %v2354 = vld [vmem:[#allocation13 + $0x5c] sm:$0xf]
        %v2355 = vld [vmem:[#allocation13 + $0x60] sm:$0xf]
        %v2356 = vld [vmem:[#allocation13 + $0x64] sm:$0xf]
        %v2357 = vld [vmem:[#allocation13 + $0x68] sm:$0xf]
        %v2358 = vld [vmem:[#allocation13 + $0x6c] sm:$0xf]
        %v2359 = vld [vmem:[#allocation13 + $0x70] sm:$0xf]
        %v2360 = vld [vmem:[#allocation13 + $0x74] sm:$0xf]
        %v2361 = vld [vmem:[#allocation13 + $0x78] sm:$0xf]
        %v2362 = vld [vmem:[#allocation13 + $0x7c] sm:$0xf]
        %v2363 = vld [vmem:[%s10] sm:$0x3]
        %v2365 = vperm.slane %v2363, 0
        %v2366 = vperm.slane %v2363, 1
        %v2401 = vunpack.c.l.b16 %v2331
        %v2402 = vunpack.c.l.b16 %v2332
        %v2403 = vunpack.c.l.b16 %v2333
        %v2404 = vunpack.c.l.b16 %v2334
        %v2405 = vunpack.c.l.b16 %v2335
        %v2406 = vunpack.c.l.b16 %v2336
        %v2407 = vunpack.c.l.b16 %v2337
        %v2408 = vunpack.c.l.b16 %v2338
        %v2409 = vunpack.c.l.b16 %v2339
        %v2410 = vunpack.c.l.b16 %v2340
        %v2411 = vunpack.c.l.b16 %v2341
        %v2412 = vunpack.c.l.b16 %v2342
        %v2413 = vunpack.c.l.b16 %v2343
        %v2414 = vunpack.c.l.b16 %v2344
        %v2415 = vunpack.c.l.b16 %v2345
        %v2416 = vunpack.c.l.b16 %v2346
        %v2417 = vunpack.c.l.b16 %v2347
        %v2418 = vunpack.c.l.b16 %v2348
        %v2419 = vunpack.c.l.b16 %v2349
        %v2420 = vunpack.c.l.b16 %v2350
        %v2421 = vunpack.c.l.b16 %v2351
        %v2422 = vunpack.c.l.b16 %v2352
        %v2423 = vunpack.c.l.b16 %v2353
        %v2424 = vunpack.c.l.b16 %v2354
        %v2425 = vunpack.c.l.b16 %v2355
        %v2426 = vunpack.c.l.b16 %v2356
        %v2427 = vunpack.c.l.b16 %v2357
        %v2428 = vunpack.c.l.b16 %v2358
        %v2429 = vunpack.c.l.b16 %v2359
        %v2430 = vunpack.c.l.b16 %v2360
        %v2431 = vunpack.c.l.b16 %v2361
        %v2432 = vunpack.c.l.b16 %v2362
        %v2433 = vpack.c.b16 %v2402, %v2401
        %v2434 = vpack.c.b16 %v2404, %v2403
        %v2435 = vpack.c.b16 %v2406, %v2405
        %v2436 = vpack.c.b16 %v2408, %v2407
        %v2437 = vpack.c.b16 %v2410, %v2409
        %v2438 = vpack.c.b16 %v2412, %v2411
        %v2439 = vpack.c.b16 %v2414, %v2413
        %v2440 = vpack.c.b16 %v2416, %v2415
        %v2441 = vpack.c.b16 %v2418, %v2417
        %v2442 = vpack.c.b16 %v2420, %v2419
        %v2443 = vpack.c.b16 %v2422, %v2421
        %v2444 = vpack.c.b16 %v2424, %v2423
        %v2445 = vpack.c.b16 %v2426, %v2425
        %v2446 = vpack.c.b16 %v2428, %v2427
        %v2447 = vpack.c.b16 %v2430, %v2429
        %v2448 = vpack.c.b16 %v2432, %v2431
        %2465 = vmatpush.bf16.xpose.msra.mxu0 %v2440
        %2466 = vmatpush.bf16.xpose.msra.mxu0 %v2439
        %2467 = vmatpush.bf16.xpose.msra.mxu0 %v2438
        %2468 = vmatpush.bf16.xpose.msra.mxu0 %v2437
        %2469 = vmatpush.bf16.xpose.msra.mxu0 %v2436
        %2470 = vmatpush.bf16.xpose.msra.mxu0 %v2435
        %2471 = vmatpush.bf16.xpose.msra.mxu0 %v2434
        %2472 = vmatpush.bf16.xpose.msra.mxu0 %v2433
        %2473 = vmatmul.bf16.gmra.mxu0 %v2329
        %v2474 = vpop.f32.mrf.mxu0
        %v2475 = vadd.f32 %v2365, %v2474
        %v2476 = vpop.f32.mrf.mxu0
        %v2477 = vadd.f32 %v2365, %v2476
        %2478 = vmatmul.bf16.gmra.mxu0 %v2330
        %v2479 = vpop.f32.mrf.mxu0
        %v2480 = vadd.f32 %v2365, %v2479
        %v2481 = vpop.f32.mrf.mxu0
        %v2482 = vadd.f32 %v2365, %v2481
        %2483 = vdwg.mxu0
        %2484 = vmatpush.bf16.xpose.msra.mxu0 %v2448
        %2485 = vmatpush.bf16.xpose.msra.mxu0 %v2447
        %2486 = vmatpush.bf16.xpose.msra.mxu0 %v2446
        %2487 = vmatpush.bf16.xpose.msra.mxu0 %v2445
        %2488 = vmatpush.bf16.xpose.msra.mxu0 %v2444
        %2489 = vmatpush.bf16.xpose.msra.mxu0 %v2443
        %2490 = vmatpush.bf16.xpose.msra.mxu0 %v2442
        %2491 = vmatpush.bf16.xpose.msra.mxu0 %v2441
        %2492 = vmatmul.bf16.gmra.mxu0 %v2329
        %v2493 = vpop.f32.mrf.mxu0
        %v2494 = vadd.f32 %v2366, %v2493
        %v2495 = vpop.f32.mrf.mxu0
        %v2496 = vadd.f32 %v2366, %v2495
        %2497 = vmatmul.bf16.gmra.mxu0 %v2330
        %v2498 = vpop.f32.mrf.mxu0
        %v2499 = vadd.f32 %v2366, %v2498
        %v2500 = vpop.f32.mrf.mxu0
        %v2501 = vadd.f32 %v2366, %v2500
        %2502 = vdwg.mxu0
        %v2503 = vmax.f32 %v2475, 0.0
        %v2504 = vmax.f32 %v2494, 0.0
        %v2505 = vmax.f32 %v2477, 0.0
        %v2506 = vmax.f32 %v2496, 0.0
        %v2507 = vmax.f32 %v2480, 0.0
        %v2508 = vmax.f32 %v2499, 0.0
        %v2509 = vmax.f32 %v2482, 0.0
        %v2510 = vmax.f32 %v2501, 0.0
        %v2511 = vpack.c.bf16 %v2505, %v2503
        %v2512 = vpack.c.bf16 %v2506, %v2504
        %v2513 = vpack.c.bf16 %v2509, %v2507
        %v2514 = vpack.c.bf16 %v2510, %v2508
        %v2515 = vld [vmem:[#allocation14] sm:$0xff]
        %v2516 = vld [vmem:[#allocation14 + $0x8] sm:$0xff]
        %v2517 = vld [vmem:[#allocation14 + $0x10] sm:$0xff]
        %v2518 = vld [vmem:[#allocation14 + $0x18] sm:$0xff]
        %v2519 = vld [vmem:[#allocation14 + $0x20] sm:$0xff]
        %v2520 = vld [vmem:[#allocation14 + $0x28] sm:$0xff]
        %v2521 = vld [vmem:[#allocation14 + $0x30] sm:$0xff]
        %v2522 = vld [vmem:[#allocation14 + $0x38] sm:$0xff]
        %v2523 = vld [vmem:[#allocation14 + $0x40] sm:$0xff]
        %v2524 = vld [vmem:[#allocation14 + $0x48] sm:$0xff]
        %v2525 = vld [vmem:[#allocation14 + $0x50] sm:$0xff]
        %v2526 = vld [vmem:[#allocation14 + $0x58] sm:$0xff]
        %v2527 = vld [vmem:[#allocation14 + $0x60] sm:$0xff]
        %v2528 = vld [vmem:[#allocation14 + $0x68] sm:$0xff]
        %v2529 = vld [vmem:[#allocation14 + $0x70] sm:$0xff]
        %v2530 = vld [vmem:[#allocation14 + $0x78] sm:$0xff]
        %v2531 = vld [vmem:[%s12] sm:$0x1]
        %v2533 = vperm.slane %v2531, 0
        %v2551 = vunpack.c.l.b16 %v2515
        %v2552 = vunpack.c.h.b16 %v2515
        %v2553 = vunpack.c.l.b16 %v2516
        %v2554 = vunpack.c.h.b16 %v2516
        %v2555 = vunpack.c.l.b16 %v2517
        %v2556 = vunpack.c.h.b16 %v2517
        %v2557 = vunpack.c.l.b16 %v2518
        %v2558 = vunpack.c.h.b16 %v2518
        %v2559 = vunpack.c.l.b16 %v2519
        %v2560 = vunpack.c.h.b16 %v2519
        %v2561 = vunpack.c.l.b16 %v2520
        %v2562 = vunpack.c.h.b16 %v2520
        %v2563 = vunpack.c.l.b16 %v2521
        %v2564 = vunpack.c.h.b16 %v2521
        %v2565 = vunpack.c.l.b16 %v2522
        %v2566 = vunpack.c.h.b16 %v2522
        %v2567 = vunpack.c.l.b16 %v2523
        %v2568 = vunpack.c.h.b16 %v2523
        %v2569 = vunpack.c.l.b16 %v2524
        %v2570 = vunpack.c.h.b16 %v2524
        %v2571 = vunpack.c.l.b16 %v2525
        %v2572 = vunpack.c.h.b16 %v2525
        %v2573 = vunpack.c.l.b16 %v2526
        %v2574 = vunpack.c.h.b16 %v2526
        %v2575 = vunpack.c.l.b16 %v2527
        %v2576 = vunpack.c.h.b16 %v2527
        %v2577 = vunpack.c.l.b16 %v2528
        %v2578 = vunpack.c.h.b16 %v2528
        %v2579 = vunpack.c.l.b16 %v2529
        %v2580 = vunpack.c.h.b16 %v2529
        %v2581 = vunpack.c.l.b16 %v2530
        %v2582 = vunpack.c.h.b16 %v2530
        %v2583 = vpack.c.b16 %v2553, %v2551
        %v2584 = vpack.c.b16 %v2554, %v2552
        %v2585 = vpack.c.b16 %v2557, %v2555
        %v2586 = vpack.c.b16 %v2558, %v2556
        %v2587 = vpack.c.b16 %v2561, %v2559
        %v2588 = vpack.c.b16 %v2562, %v2560
        %v2589 = vpack.c.b16 %v2565, %v2563
        %v2590 = vpack.c.b16 %v2566, %v2564
        %v2591 = vpack.c.b16 %v2569, %v2567
        %v2592 = vpack.c.b16 %v2570, %v2568
        %v2593 = vpack.c.b16 %v2573, %v2571
        %v2594 = vpack.c.b16 %v2574, %v2572
        %v2595 = vpack.c.b16 %v2577, %v2575
        %v2596 = vpack.c.b16 %v2578, %v2576
        %v2597 = vpack.c.b16 %v2581, %v2579
        %v2598 = vpack.c.b16 %v2582, %v2580
        %2615 = vmatpush.bf16.xpose.msra.mxu0 %v2597
        %2616 = vmatpush.bf16.xpose.msra.mxu0 %v2595
        %2617 = vmatpush.bf16.xpose.msra.mxu0 %v2593
        %2618 = vmatpush.bf16.xpose.msra.mxu0 %v2591
        %2619 = vmatpush.bf16.xpose.msra.mxu0 %v2589
        %2620 = vmatpush.bf16.xpose.msra.mxu0 %v2587
        %2621 = vmatpush.bf16.xpose.msra.mxu0 %v2585
        %2622 = vmatpush.bf16.xpose.msra.mxu0 %v2583
        %2623 = vmatmul.bf16.gmra.mxu0 %v2511
        %v2624 = vpop.f32.mrf.mxu0
        %v2625 = vadd.f32 %v2533, %v2624
        %v2626 = vpop.f32.mrf.mxu0
        %v2627 = vadd.f32 %v2533, %v2626
        %2628 = vmatmul.bf16.gmra.mxu0 %v2513
        %v2629 = vpop.f32.mrf.mxu0
        %v2630 = vadd.f32 %v2533, %v2629
        %v2631 = vpop.f32.mrf.mxu0
        %v2632 = vadd.f32 %v2533, %v2631
        %2633 = vdwg.mxu0
        %2634 = vmatpush.bf16.xpose.msra.mxu0 %v2598
        %2635 = vmatpush.bf16.xpose.msra.mxu0 %v2596
        %2636 = vmatpush.bf16.xpose.msra.mxu0 %v2594
        %2637 = vmatpush.bf16.xpose.msra.mxu0 %v2592
        %2638 = vmatpush.bf16.xpose.msra.mxu0 %v2590
        %2639 = vmatpush.bf16.xpose.msra.mxu0 %v2588
        %2640 = vmatpush.bf16.xpose.msra.mxu0 %v2586
        %2641 = vmatpush.bf16.xpose.msra.mxu0 %v2584
        %2642 = vmatmul.bf16.gmra.mxu0 %v2512
        %v2643 = vpop.f32.mrf.mxu0
        %v2644 = vadd.f32 %v2625, %v2643
        %v2645 = vpop.f32.mrf.mxu0
        %v2646 = vadd.f32 %v2627, %v2645
        %2647 = vmatmul.bf16.gmra.mxu0 %v2514
        %v2648 = vpop.f32.mrf.mxu0
        %v2649 = vadd.f32 %v2630, %v2648
        %v2650 = vpop.f32.mrf.mxu0
        %v2651 = vadd.f32 %v2632, %v2650
        %2652 = vdwg.mxu0
        %v2653 = vadd.f32 %v2165, %v2644
        %v2654 = vadd.f32 %v2166, %v2646
        %v2655 = vadd.f32 %v2167, %v2649
        %v2656 = vadd.f32 %v2168, %v2651
        %2657 = vst [vmem:[%s571] sm:$0xff] %v2653
        %2658 = vst [vmem:[%s571 + $0x8] sm:$0xff] %v2654
        %2659 = vst [vmem:[%s571 + $0x10] sm:$0xff] %v2655
        %2660 = vst [vmem:[%s571 + $0x18] sm:$0xff] %v2656
        %s2661 = sand.u32 %s320, 1
        %s2662 = scalar_lea.sflag [#allocation4], %s2661
        %s2663 = sand.u32 %s320, 1
        %s2664 = smul.addr %s2663, 32
        %s2665 = scalar_lea.vmem [#allocation16], %s2664
        // Predicated region
        $region105: #{tpu_custom_call.1} parent=71 // pred_check
          %p2666 = pneg %p330
        $region106: #{tpu_custom_call.1} parent=71 // pred_check_branch
          %2668 = sbr.rel (%p2666) target = $region108
        $region107: #{tpu_custom_call.1} parent=71 // pred_region
          %s2669 = smul.u32 2, %s34
          %2671 = vsyncadd %s2662, 0
          %s2672 = smul.addr %s2669, 2
          %s2673 = smul.addr %s2672, 8
          %s2674 = scalar_lea.hbm %s13, %s2673
          %s2675 = sshll.u32 %s2665, 4
          %s2676 = int_to_ptr.vmem [resolvable:$true] %s2675
          %s2677 = sshll.u32 %s2674, 4
          %s2678 = int_to_ptr.hbm [resolvable:$true] %s2677
          %2683 = dma.vmem_to_hbm [thread:$0]  %s2676, 512, %s2678, %s2662, 128, 128, 8
        $region108: #{tpu_custom_call.1} parent=71 // pred_fallthru
          _
      $region72: #{tpu_custom_call.1} parent=5 // pred_fallthru
        _
      %p2684 = scmp.le.s32.totalorder 2, %s29
      // Predicated region
      $region109: #{tpu_custom_call.1} parent=5 // pred_check
        %p2685 = pneg %p2684
      $region110: #{tpu_custom_call.1} parent=5 // pred_check_branch
        %2687 = sbr.rel (%p2685) target = $region112
      $region111: #{tpu_custom_call.1} parent=5 // pred_region
        %s2688 = ssub.s32 %s29, 2
        // Predicated region
        $region113: #{tpu_custom_call.1} parent=111 // pred_check
          %p2689 = pneg %p336
        $region114: #{tpu_custom_call.1} parent=111 // pred_check_branch
          %2691 = sbr.rel (%p2689) target = $region116
        $region115: #{tpu_custom_call.1} parent=111 // pred_region
          %s2692 = sand.u32 %s321, 1
          %s2693 = scalar_lea.sflag [#allocation4], %s2692
          %s2694 = sand.u32 %s321, 1
          %s2695 = smul.addr %s2694, 32
          %s2696 = scalar_lea.vmem [#allocation16], %s2695
          %2698 = dma.done %s2693, 512
        $region116: #{tpu_custom_call.1} parent=111 // pred_fallthru
          _
      $region112: #{tpu_custom_call.1} parent=5 // pred_fallthru
        _
    $region6: #{tpu_custom_call.1} parent=1 // loop_footer
      %s33 = sadd.s32 1, %s29
    $region7: #{tpu_custom_call.1} parent=1 // loop_footer_branch
      %28 = sbr.rel target = $region3
    $region8: #{tpu_custom_call.1} parent=1 // loop_exit
      _
    %2699 = vsyncpa [#allocation3], 1
    %s2700 = scalar_lea.sflag [#allocation3], 1
    %2701 = vsyncpa %s2700, 1
    %2702 = vsyncpa [#allocation6], 1
    %2703 = vsyncpa [#allocation9], 1
    %2704 = vsyncpa [#allocation12], 1
    %2705 = vsyncpa [#allocation15], 1
    %2706 = vsyncpa [#allocation4], 1
    %s2707 = scalar_lea.sflag [#allocation4], 1
    %2708 = vsyncpa %s2707, 1

</llo_original>
